<compile_context>
chip_gen: v5e
topology: v5e:2x2
jax: 0.10.0
libtpu: 0.0.40
codegen_flags: <defaults>
</compile_context>

<pallas_src>
import functools

import jax
import jax.numpy as jnp
import numpy as np
from jax.experimental import pallas as pl
from jax.experimental.pallas import tpu as pltpu

_HIDDEN = 512          # fixed by the module
_LANE = 128            # TPU lane width
_TB_MAX = 256          # batch tile (multiple of MXU M dim on v7x)


def _critic_kernel(s_ref, a_ref, w1s_ref, w1a_ref, w2_ref, w3_ref, bias_ref,
                   out_ref):
    nq_pad = out_ref.shape[-1]

    # Layer 1: [s, a] @ W1 == s @ W1_s + a @ W1_a  (wrapper-side split, exact).
    h = (jnp.dot(s_ref[...], w1s_ref[...], preferred_element_type=jnp.float32)
         + jnp.dot(a_ref[...], w1a_ref[...], preferred_element_type=jnp.float32)
         + bias_ref[0:1, :])                                   # (TB, H) f32
    h = jnp.maximum(h, 0.0)

    # Layer 2: bf16 MXU operands, f32 accumulate, f32 bias/ReLU.
    h = (jnp.dot(h.astype(jnp.bfloat16), w2_ref[...],
                 preferred_element_type=jnp.float32)
         + bias_ref[1:2, :])                                   # (TB, H) f32
    h = jnp.maximum(h, 0.0)

    # Layer 3 -> padded quantiles (lane-dense, static lane-aligned bias slice).
    q = (jnp.dot(h.astype(jnp.bfloat16), w3_ref[...],
                 preferred_element_type=jnp.float32)
         + bias_ref[2:3, :nq_pad])                             # (TB, nq_pad)
    out_ref[...] = q.astype(out_ref.dtype)


def quantile_critics_forward(states, actions, params):
    """params (PyTorch Linear layout, transposed, stacked per critic):
         w1: (C, state_dim+action_dim, H), b1: (C, 1, H)
         w2: (C, H, H),                    b2: (C, 1, H)
         w3: (C, H, nq),                   b3: (C, 1, nq)
       Returns (B, C, nq) float32 -- matches torch.stack(..., dim=1)."""
    states = states.astype(jnp.float32)
    actions = actions.astype(jnp.float32)
    B, Ds = states.shape
    _, Da = actions.shape
    C, in_dim, H = params["w1"].shape
    nq = params["w3"].shape[-1]
    nq_pad = pl.cdiv(nq, _LANE) * _LANE

    # ---- batch tiling ------------------------------------------------------
    if B <= _TB_MAX:
        TB, B_pad = B, B
    else:
        TB = _TB_MAX
        B_pad = pl.cdiv(B, TB) * TB
    NB = B_pad // TB

    s_p = states if B_pad == B else jnp.pad(states, ((0, B_pad - B), (0, 0)))
    a_p = actions if B_pad == B else jnp.pad(actions, ((0, B_pad - B), (0, 0)))
    s_p = s_p.astype(jnp.bfloat16)
    a_p = a_p.astype(jnp.bfloat16)

    # ---- weight prep (trace-time; hoist out of the train step if desired) --
    w1 = params["w1"].astype(jnp.bfloat16)
    w1_s = w1[:, :Ds, :]                                       # (C, Ds, H)
    w1_a = w1[:, Ds:, :]                                       # (C, Da, H)
    w2 = params["w2"].astype(jnp.bfloat16)                     # (C, H, H)
    w3_p = jnp.pad(params["w3"].astype(jnp.bfloat16),
                   ((0, 0), (0, 0), (0, nq_pad - nq)))         # (C, H, nq_pad)

    # Merged bias block (C, 3, Hb): rows = [b1, b2, b3 zero-padded].
    Hb = max(H, nq_pad)
    b1 = jnp.pad(params["b1"].astype(jnp.float32), ((0, 0), (0, 0), (0, Hb - H)))
    b2 = jnp.pad(params["b2"].astype(jnp.float32), ((0, 0), (0, 0), (0, Hb - H)))
    b3 = jnp.pad(params["b3"].astype(jnp.float32), ((0, 0), (0, 0), (0, Hb - nq)))
    biases = jnp.concatenate([b1, b2, b3], axis=1)             # (C, 3, Hb)

    # ---- grid / specs ------------------------------------------------------
    grid_spec = pltpu.PrefetchScalarGridSpec(
        num_scalar_prefetch=0,
        grid=(C, NB),                          # batch innermost -> weights dedupe
        in_specs=[
            pl.BlockSpec((TB, Ds), lambda c, b: (b, 0)),                      # states
            pl.BlockSpec((TB, Da), lambda c, b: (b, 0)),                      # actions
            pl.BlockSpec((pl.Squeezed(), Ds, H), lambda c, b: (c, 0, 0)),     # w1_s
            pl.BlockSpec((pl.Squeezed(), Da, H), lambda c, b: (c, 0, 0)),     # w1_a
            pl.BlockSpec((pl.Squeezed(), H, H), lambda c, b: (c, 0, 0)),      # w2
            pl.BlockSpec((pl.Squeezed(), H, nq_pad), lambda c, b: (c, 0, 0)), # w3 (padded)
            pl.BlockSpec((pl.Squeezed(), 3, Hb), lambda c, b: (c, 0, 0)),     # biases
        ],
        out_specs=pl.BlockSpec((pl.Squeezed(), TB, nq_pad), lambda c, b: (c, b, 0)),
    )

    weight_bytes = 2 * (w1_s.size + w1_a.size + w2.size + w3_p.size) + 4 * biases.size
    act_bytes = 2 * (s_p.size + a_p.size) + 4 * C * B_pad * nq_pad
    cost = pl.CostEstimate(
        flops=2 * B_pad * C * (in_dim * H + H * H + H * nq_pad),
        transcendentals=0,
        bytes_accessed=int(weight_bytes + act_bytes),
    )

    out_cbq = pl.pallas_call(
        _critic_kernel,
        out_shape=jax.ShapeDtypeStruct((C, B_pad, nq_pad), jnp.float32),
        grid_spec=grid_spec,
        compiler_params=pltpu.CompilerParams(
            dimension_semantics=("parallel", "parallel")),
        cost_estimate=cost,
    )(s_p, a_p, w1_s, w1_a, w2, w3_p, biases)

    # (C, B_pad, nq_pad) -> (B, C, nq)   (torch.stack(dim=1) semantics)
    return jnp.transpose(out_cbq, (1, 0, 2))[:B, :, :nq]


def init_params(key, state_dim, action_dim, n_quantiles, n_critics, hidden=_HIDDEN):
    """Deterministic PyTorch-Linear-style init: U(-1/sqrt(fan_in), 1/sqrt(fan_in))."""
    in_dim = state_dim + action_dim
    keys = jax.random.split(key, 6)

    def uinit(k, shape, fan_in):
        bound = 1.0 / np.sqrt(fan_in)
        return jax.random.uniform(k, shape, jnp.float32, -bound, bound)

    return {
        "w1": uinit(keys[0], (n_critics, in_dim, hidden), in_dim),
        "b1": uinit(keys[1], (n_critics, 1, hidden), in_dim),
        "w2": uinit(keys[2], (n_critics, hidden, hidden), hidden),
        "b2": uinit(keys[3], (n_critics, 1, hidden), hidden),
        "w3": uinit(keys[4], (n_critics, hidden, n_quantiles), hidden),
        "b3": uinit(keys[5], (n_critics, 1, n_quantiles), hidden),
    }


def reference_forward(states, actions, params):
    """Pure-JAX reference emulating the kernel's numerics exactly:
    bf16 inputs/weights/inter-layer activations, f32 MXU accumulation,
    f32 bias-add/ReLU."""
    Ds = states.shape[-1]
    s = states.astype(jnp.bfloat16)
    a = actions.astype(jnp.bfloat16)
    C = params["w1"].shape[0]
    outs = []
    for c in range(C):
        w1 = params["w1"][c].astype(jnp.bfloat16)
        w2 = params["w2"][c].astype(jnp.bfloat16)
        w3 = params["w3"][c].astype(jnp.bfloat16)
        h = (jnp.dot(s, w1[:Ds], preferred_element_type=jnp.float32)
             + jnp.dot(a, w1[Ds:], preferred_element_type=jnp.float32)
             + params["b1"][c][0])
        h = jnp.maximum(h, 0.0)
        h = (jnp.dot(h.astype(jnp.bfloat16), w2, preferred_element_type=jnp.float32)
             + params["b2"][c][0])
        h = jnp.maximum(h, 0.0)
        q = (jnp.dot(h.astype(jnp.bfloat16), w3, preferred_element_type=jnp.float32)
             + params["b3"][c][0])
        outs.append(q)
    return jnp.stack(outs, axis=1)


if __name__ == "__main__":
    # Small, module-consistent shapes (hidden=512 is fixed by the module).
    B = 2
    state_dim = 8
    action_dim = 4
    n_quantiles = 25
    n_critics = 2

    key = jax.random.PRNGKey(0)
    k_s, k_a, k_p = jax.random.split(key, 3)
    states = jax.random.normal(k_s, (B, state_dim), jnp.float32)
    actions = jax.random.normal(k_a, (B, action_dim), jnp.float32)
    params = init_params(k_p, state_dim, action_dim, n_quantiles, n_critics)

    fwd = jax.jit(quantile_critics_forward)
    out = jax.block_until_ready(fwd(states, actions, params))
    assert out.shape == (B, n_critics, n_quantiles), out.shape

    ref = jax.block_until_ready(reference_forward(states, actions, params))
    np.testing.assert_allclose(np.asarray(out), np.asarray(ref), rtol=1e-2, atol=1e-2)

    print("KERNEL_OK")
</pallas_src>

<mosaic_0001>
module attributes {stable_mosaic.version = 11 : i64} {
  func.func @_critic_kernel(%arg0: i32, %arg1: i32, %arg2: memref<2x8xbf16, #tpu.memory_space<vmem>>, %arg3: memref<2x4xbf16, #tpu.memory_space<vmem>>, %arg4: memref<1x8x512xbf16, #tpu.memory_space<vmem>>, %arg5: memref<1x4x512xbf16, #tpu.memory_space<vmem>>, %arg6: memref<1x512x512xbf16, #tpu.memory_space<vmem>>, %arg7: memref<1x512x128xbf16, #tpu.memory_space<vmem>>, %arg8: memref<1x3x512xf32, #tpu.memory_space<vmem>>, %arg9: memref<1x2x128xf32, #tpu.memory_space<vmem>>) attributes {dimension_semantics = [#tpu.dimension_semantics<parallel>, #tpu.dimension_semantics<parallel>], iteration_bounds = array<i64: 2, 1>, scalar_prefetch = 0 : i64, scratch_operands = 0 : i64, tpu.core_type = #tpu.core_type<tc>, window_params = [{transform_indices = @transform_0, window_bounds = array<i64: 2, 8>}, {transform_indices = @transform_1, window_bounds = array<i64: 2, 4>}, {transform_indices = @transform_2, window_bounds = array<i64: 1, 8, 512>}, {transform_indices = @transform_3, window_bounds = array<i64: 1, 4, 512>}, {transform_indices = @transform_4, window_bounds = array<i64: 1, 512, 512>}, {transform_indices = @transform_5, window_bounds = array<i64: 1, 512, 128>}, {transform_indices = @transform_6, window_bounds = array<i64: 1, 3, 512>}, {transform_indices = @transform_7, window_bounds = array<i64: 1, 2, 128>}]} {
    %c0 = arith.constant 0 : index
    %c0_0 = arith.constant 0 : index
    %0 = vector.load %arg2[%c0, %c0_0] : memref<2x8xbf16, #tpu.memory_space<vmem>>, vector<2x8xbf16>
    %c0_1 = arith.constant 0 : index
    %c0_2 = arith.constant 0 : index
    %c0_3 = arith.constant 0 : index
    %1 = vector.load %arg4[%c0_1, %c0_2, %c0_3] : memref<1x8x512xbf16, #tpu.memory_space<vmem>>, vector<1x8x512xbf16>
    %2 = vector.shape_cast %1 : vector<1x8x512xbf16> to vector<8x512xbf16>
    %cst = arith.constant dense<0.000000e+00> : vector<2x512xf32>
    %3 = tpu.matmul %0, %2, %cst {dimension_numbers = #tpu.dot_dimension_numbers<[1], [0], [0], [1], [0, 0, 1, 1], [], []>} : vector<2x8xbf16>, vector<8x512xbf16>, vector<2x512xf32> -> vector<2x512xf32>
    %c0_4 = arith.constant 0 : index
    %c0_5 = arith.constant 0 : index
    %4 = vector.load %arg3[%c0_4, %c0_5] : memref<2x4xbf16, #tpu.memory_space<vmem>>, vector<2x4xbf16>
    %c0_6 = arith.constant 0 : index
    %c0_7 = arith.constant 0 : index
    %c0_8 = arith.constant 0 : index
    %5 = vector.load %arg5[%c0_6, %c0_7, %c0_8] : memref<1x4x512xbf16, #tpu.memory_space<vmem>>, vector<1x4x512xbf16>
    %6 = vector.shape_cast %5 : vector<1x4x512xbf16> to vector<4x512xbf16>
    %cst_9 = arith.constant dense<0.000000e+00> : vector<2x512xf32>
    %7 = tpu.matmul %4, %6, %cst_9 {dimension_numbers = #tpu.dot_dimension_numbers<[1], [0], [0], [1], [0, 0, 1, 1], [], []>} : vector<2x4xbf16>, vector<4x512xbf16>, vector<2x512xf32> -> vector<2x512xf32>
    %8 = arith.addf %3, %7 : vector<2x512xf32>
    %c0_10 = arith.constant 0 : index
    %c0_11 = arith.constant 0 : index
    %c0_12 = arith.constant 0 : index
    %9 = vector.load %arg8[%c0_10, %c0_11, %c0_12] : memref<1x3x512xf32, #tpu.memory_space<vmem>>, vector<1x1x512xf32>
    %10 = vector.shape_cast %9 : vector<1x1x512xf32> to vector<1x512xf32>
    %11 = vector.broadcast %10 : vector<1x512xf32> to vector<2x512xf32>
    %12 = arith.addf %8, %11 : vector<2x512xf32>
    %cst_13 = arith.constant 0.000000e+00 : f32
    %13 = vector.broadcast %cst_13 : f32 to vector<2x512xf32>
    %14 = arith.maximumf %12, %13 : vector<2x512xf32>
    %15 = arith.truncf %14 : vector<2x512xf32> to vector<2x512xbf16>
    %c0_14 = arith.constant 0 : index
    %c0_15 = arith.constant 0 : index
    %c0_16 = arith.constant 0 : index
    %16 = vector.load %arg6[%c0_14, %c0_15, %c0_16] : memref<1x512x512xbf16, #tpu.memory_space<vmem>>, vector<1x512x512xbf16>
    %17 = vector.shape_cast %16 : vector<1x512x512xbf16> to vector<512x512xbf16>
    %cst_17 = arith.constant dense<0.000000e+00> : vector<2x512xf32>
    %18 = tpu.matmul %15, %17, %cst_17 {dimension_numbers = #tpu.dot_dimension_numbers<[1], [0], [0], [1], [0, 0, 1, 1], [], []>} : vector<2x512xbf16>, vector<512x512xbf16>, vector<2x512xf32> -> vector<2x512xf32>
    %c0_18 = arith.constant 0 : index
    %c1 = arith.constant 1 : index
    %c0_19 = arith.constant 0 : index
    %19 = vector.load %arg8[%c0_18, %c1, %c0_19] : memref<1x3x512xf32, #tpu.memory_space<vmem>>, vector<1x1x512xf32>
    %20 = vector.shape_cast %19 : vector<1x1x512xf32> to vector<1x512xf32>
    %21 = vector.broadcast %20 : vector<1x512xf32> to vector<2x512xf32>
    %22 = arith.addf %18, %21 : vector<2x512xf32>
    %cst_20 = arith.constant 0.000000e+00 : f32
    %23 = vector.broadcast %cst_20 : f32 to vector<2x512xf32>
    %24 = arith.maximumf %22, %23 : vector<2x512xf32>
    %25 = arith.truncf %24 : vector<2x512xf32> to vector<2x512xbf16>
    %c0_21 = arith.constant 0 : index
    %c0_22 = arith.constant 0 : index
    %c0_23 = arith.constant 0 : index
    %26 = vector.load %arg7[%c0_21, %c0_22, %c0_23] : memref<1x512x128xbf16, #tpu.memory_space<vmem>>, vector<1x512x128xbf16>
    %27 = vector.shape_cast %26 : vector<1x512x128xbf16> to vector<512x128xbf16>
    %cst_24 = arith.constant dense<0.000000e+00> : vector<2x128xf32>
    %28 = tpu.matmul %25, %27, %cst_24 {dimension_numbers = #tpu.dot_dimension_numbers<[1], [0], [0], [1], [0, 0, 1, 1], [], []>} : vector<2x512xbf16>, vector<512x128xbf16>, vector<2x128xf32> -> vector<2x128xf32>
    %c0_25 = arith.constant 0 : index
    %c2 = arith.constant 2 : index
    %c0_26 = arith.constant 0 : index
    %29 = vector.load %arg8[%c0_25, %c2, %c0_26] : memref<1x3x512xf32, #tpu.memory_space<vmem>>, vector<1x1x128xf32>
    %30 = vector.shape_cast %29 : vector<1x1x128xf32> to vector<1x128xf32>
    %31 = vector.broadcast %30 : vector<1x128xf32> to vector<2x128xf32>
    %32 = arith.addf %28, %31 : vector<2x128xf32>
    %c0_27 = arith.constant 0 : index
    %c0_28 = arith.constant 0 : index
    %c0_29 = arith.constant 0 : index
    %33 = vector.load %arg9[%c0_27, %c0_28, %c0_29] : memref<1x2x128xf32, #tpu.memory_space<vmem>>, vector<1x2x128xf32>
    %34 = vector.shape_cast %33 : vector<1x2x128xf32> to vector<2x128xf32>
    %35 = vector.shape_cast %32 : vector<2x128xf32> to vector<1x2x128xf32>
    tpu.vector_store %arg9[%c0_27, %c0_28, %c0_29], %35 {strides = array<i32>} : memref<1x2x128xf32, #tpu.memory_space<vmem>>, vector<1x2x128xf32>,
    return
  }
  func.func @transform_0(%arg0: i32, %arg1: i32) -> (i32, i32) {
    %c0_i32 = arith.constant 0 : i32
    %c0_i32_0 = arith.constant 0 : i32
    return %arg1, %c0_i32 : i32, i32
  }
  func.func @transform_1(%arg0: i32, %arg1: i32) -> (i32, i32) {
    %c0_i32 = arith.constant 0 : i32
    %c0_i32_0 = arith.constant 0 : i32
    return %arg1, %c0_i32 : i32, i32
  }
  func.func @transform_2(%arg0: i32, %arg1: i32) -> (i32, i32, i32) {
    %c0_i32 = arith.constant 0 : i32
    %c0_i32_0 = arith.constant 0 : i32
    %c0_i32_1 = arith.constant 0 : i32
    return %arg0, %c0_i32, %c0_i32_0 : i32, i32, i32
  }
  func.func @transform_3(%arg0: i32, %arg1: i32) -> (i32, i32, i32) {
    %c0_i32 = arith.constant 0 : i32
    %c0_i32_0 = arith.constant 0 : i32
    %c0_i32_1 = arith.constant 0 : i32
    return %arg0, %c0_i32, %c0_i32_0 : i32, i32, i32
  }
  func.func @transform_4(%arg0: i32, %arg1: i32) -> (i32, i32, i32) {
    %c0_i32 = arith.constant 0 : i32
    %c0_i32_0 = arith.constant 0 : i32
    %c0_i32_1 = arith.constant 0 : i32
    return %arg0, %c0_i32, %c0_i32_0 : i32, i32, i32
  }
  func.func @transform_5(%arg0: i32, %arg1: i32) -> (i32, i32, i32) {
    %c0_i32 = arith.constant 0 : i32
    %c0_i32_0 = arith.constant 0 : i32
    %c0_i32_1 = arith.constant 0 : i32
    return %arg0, %c0_i32, %c0_i32_0 : i32, i32, i32
  }
  func.func @transform_6(%arg0: i32, %arg1: i32) -> (i32, i32, i32) {
    %c0_i32 = arith.constant 0 : i32
    %c0_i32_0 = arith.constant 0 : i32
    %c0_i32_1 = arith.constant 0 : i32
    return %arg0, %c0_i32, %c0_i32_0 : i32, i32, i32
  }
  func.func @transform_7(%arg0: i32, %arg1: i32) -> (i32, i32, i32) {
    %c0_i32 = arith.constant 0 : i32
    %c0_i32_0 = arith.constant 0 : i32
    return %arg0, %arg1, %c0_i32 : i32, i32, i32
  }
}

</mosaic_0001>

<llo_original>
// kernel: quantile_critics_forward.1
$region0: #{quantile_critics_forward.1}
  #allocation0 [shape = 'u32[]', space=smem, size = 0x4, offset = 0x4, fixed_abs, tag = 'smem constant byte address 0x4 - core index']
  #allocation1 [shape = 'u32[72,128]{1,0:T(1,128)}', space=vmem, size = 0x9000, scoped, tag = 'internal scratch']
  %s0 = inlined_call_operand.vmem [shape: bf16[2,8], index: 0, kind: input, shape index: {}]
  %s1 = inlined_call_operand.vmem [shape: bf16[2,4], index: 1, kind: input, shape index: {}]
  %s2 = inlined_call_operand.vmem [shape: bf16[2,8,512], index: 2, kind: input, shape index: {}]
  %s3 = inlined_call_operand.vmem [shape: bf16[2,4,512], index: 3, kind: input, shape index: {}]
  %s4 = inlined_call_operand.vmem [shape: bf16[2,512,512], index: 4, kind: input, shape index: {}]
  %s5 = inlined_call_operand.vmem [shape: bf16[2,512,128], index: 5, kind: input, shape index: {}]
  %s6 = inlined_call_operand.vmem [shape: f32[2,3,512], index: 6, kind: input, shape index: {}]
  %s7 = inlined_call_operand.vmem [shape: f32[2,2,128], index: 7, kind: output, shape index: {}]
  %s8 = sld [smem:[#allocation0]]
  $region61: #{quantile_critics_forward.1} parent=0
    _
  %s10 = ssub.s32 1, %s8
  %s11 = scalar_select 0, %s10, %s8
  loop: start=0, step=1, limit=4
  $region2: #{quantile_critics_forward.1} parent=0 // loop_pre_header
    _
  $region3: #{quantile_critics_forward.1} parent=0 // loop_header
    %s13 = sphi 0, %s17
    %p14 = scmp.ge.s32.totalorder %s13, 4
    %s20 = sphi 0, %s32
    %s21 = sphi 0, %s28
    %s22 = sphi 0, %s20
    %s23 = sphi 0, %s21
    %s24 = sphi 0, %s22
    %s25 = sphi 0, %s23
    %s35 = sphi 0, %s37
    %s38 = sphi 0, %s35
    %s39 = sphi 0, %s38
    %s55 = sphi 0, %s39
    %s61 = sphi 0, %s63
    %s64 = sphi 0, %s61
    %s65 = sphi 0, %s64
    %s81 = sphi 0, %s65
    %s87 = sphi 0, %s89
    %s90 = sphi 0, %s87
    %s91 = sphi 0, %s90
    %s107 = sphi 0, %s91
    %s113 = sphi 0, %s115
    %s116 = sphi 0, %s113
    %s117 = sphi 0, %s116
    %s133 = sphi 0, %s117
    %s139 = sphi 0, %s141
    %s142 = sphi 0, %s139
    %s143 = sphi 0, %s142
    %s159 = sphi 0, %s143
    %s165 = sphi 0, %s167
    %s168 = sphi 0, %s165
    %s169 = sphi 0, %s168
    %s185 = sphi 0, %s169
    %s191 = sphi 0, %s193
    %s194 = sphi 0, %s191
    %s195 = sphi 0, %s194
    %s211 = sphi 0, %s195
    %s219 = sphi 0, %s221
    %s222 = sphi 0, %s219
    %s223 = sphi 0, %s222
    %s239 = sphi 0, %s223
  $region4: #{quantile_critics_forward.1} parent=0 // loop_header_branch
    %16 = sbr.rel (%p14) target = $region8
  $region5: #{quantile_critics_forward.1} parent=0 // loop_body
    %s18 = ssub.s32 %s13, 1
    %s19 = ssub.s32 %s13, 2
    %s26 = sadd.s32 1, %s21
    %p27 = scmp.ge.s32.totalorder %s26, 1
    %s28 = scalar_select %p27, 0, %s26
    %s29 = sadd.s32 1, %s20
    %s30 = scalar_select %p27, %s29, %s20
    %p31 = scmp.ge.s32.totalorder %s30, 2
    %s32 = scalar_select %p31, 0, %s30
    %s33 = ssub.s32 %s21, %s28
    %p34 = scmp.eq.s32.totalorder %s33, 0
    %s36 = sadd.s32 %s35, 1
    %s37 = scalar_select %p34, %s35, %s36
    %p40 = pneg %p34
    %p41 = scmp.eq.s32.totalorder %s13, 1
    %p42 = por %p40, %p41
    %p43 = scmp.ne.s32.totalorder %s35, %s38
    %p44 = scmp.eq.s32.totalorder %s13, 0
    %p45 = por %p43, %p44
    %p46 = scmp.ne.s32.totalorder %s35, %s38
    %p47 = scmp.eq.s32.totalorder %s18, 1
    %p48 = por %p46, %p47
    %p49 = scmp.ne.s32.totalorder %s38, %s39
    %p50 = scmp.eq.s32.totalorder %s18, 0
    %p51 = por %p49, %p50
    %p52 = scmp.ne.s32.totalorder %s38, %s39
    %p53 = scmp.eq.s32.totalorder %s19, 1
    %p54 = por %p52, %p53
    %p56 = scmp.ne.s32.totalorder %s39, %s55
    %p57 = scmp.eq.s32.totalorder %s19, 0
    %p58 = por %p56, %p57
    %s59 = ssub.s32 %s21, %s28
    %p60 = scmp.eq.s32.totalorder %s59, 0
    %s62 = sadd.s32 %s61, 1
    %s63 = scalar_select %p60, %s61, %s62
    %p66 = pneg %p60
    %p67 = scmp.eq.s32.totalorder %s13, 1
    %p68 = por %p66, %p67
    %p69 = scmp.ne.s32.totalorder %s61, %s64
    %p70 = scmp.eq.s32.totalorder %s13, 0
    %p71 = por %p69, %p70
    %p72 = scmp.ne.s32.totalorder %s61, %s64
    %p73 = scmp.eq.s32.totalorder %s18, 1
    %p74 = por %p72, %p73
    %p75 = scmp.ne.s32.totalorder %s64, %s65
    %p76 = scmp.eq.s32.totalorder %s18, 0
    %p77 = por %p75, %p76
    %p78 = scmp.ne.s32.totalorder %s64, %s65
    %p79 = scmp.eq.s32.totalorder %s19, 1
    %p80 = por %p78, %p79
    %p82 = scmp.ne.s32.totalorder %s65, %s81
    %p83 = scmp.eq.s32.totalorder %s19, 0
    %p84 = por %p82, %p83
    %s85 = ssub.s32 %s20, %s32
    %p86 = scmp.eq.s32.totalorder %s85, 0
    %s88 = sadd.s32 %s87, 1
    %s89 = scalar_select %p86, %s87, %s88
    %p92 = pneg %p86
    %p93 = scmp.eq.s32.totalorder %s13, 1
    %p94 = por %p92, %p93
    %p95 = scmp.ne.s32.totalorder %s87, %s90
    %p96 = scmp.eq.s32.totalorder %s13, 0
    %p97 = por %p95, %p96
    %p98 = scmp.ne.s32.totalorder %s87, %s90
    %p99 = scmp.eq.s32.totalorder %s18, 1
    %p100 = por %p98, %p99
    %p101 = scmp.ne.s32.totalorder %s90, %s91
    %p102 = scmp.eq.s32.totalorder %s18, 0
    %p103 = por %p101, %p102
    %p104 = scmp.ne.s32.totalorder %s90, %s91
    %p105 = scmp.eq.s32.totalorder %s19, 1
    %p106 = por %p104, %p105
    %p108 = scmp.ne.s32.totalorder %s91, %s107
    %p109 = scmp.eq.s32.totalorder %s19, 0
    %p110 = por %p108, %p109
    %s111 = ssub.s32 %s20, %s32
    %p112 = scmp.eq.s32.totalorder %s111, 0
    %s114 = sadd.s32 %s113, 1
    %s115 = scalar_select %p112, %s113, %s114
    %p118 = pneg %p112
    %p119 = scmp.eq.s32.totalorder %s13, 1
    %p120 = por %p118, %p119
    %p121 = scmp.ne.s32.totalorder %s113, %s116
    %p122 = scmp.eq.s32.totalorder %s13, 0
    %p123 = por %p121, %p122
    %p124 = scmp.ne.s32.totalorder %s113, %s116
    %p125 = scmp.eq.s32.totalorder %s18, 1
    %p126 = por %p124, %p125
    %p127 = scmp.ne.s32.totalorder %s116, %s117
    %p128 = scmp.eq.s32.totalorder %s18, 0
    %p129 = por %p127, %p128
    %p130 = scmp.ne.s32.totalorder %s116, %s117
    %p131 = scmp.eq.s32.totalorder %s19, 1
    %p132 = por %p130, %p131
    %p134 = scmp.ne.s32.totalorder %s117, %s133
    %p135 = scmp.eq.s32.totalorder %s19, 0
    %p136 = por %p134, %p135
    %s137 = ssub.s32 %s20, %s32
    %p138 = scmp.eq.s32.totalorder %s137, 0
    %s140 = sadd.s32 %s139, 1
    %s141 = scalar_select %p138, %s139, %s140
    %p144 = pneg %p138
    %p145 = scmp.eq.s32.totalorder %s13, 1
    %p146 = por %p144, %p145
    %p147 = scmp.ne.s32.totalorder %s139, %s142
    %p148 = scmp.eq.s32.totalorder %s13, 0
    %p149 = por %p147, %p148
    %p150 = scmp.ne.s32.totalorder %s139, %s142
    %p151 = scmp.eq.s32.totalorder %s18, 1
    %p152 = por %p150, %p151
    %p153 = scmp.ne.s32.totalorder %s142, %s143
    %p154 = scmp.eq.s32.totalorder %s18, 0
    %p155 = por %p153, %p154
    %p156 = scmp.ne.s32.totalorder %s142, %s143
    %p157 = scmp.eq.s32.totalorder %s19, 1
    %p158 = por %p156, %p157
    %p160 = scmp.ne.s32.totalorder %s143, %s159
    %p161 = scmp.eq.s32.totalorder %s19, 0
    %p162 = por %p160, %p161
    %s163 = ssub.s32 %s20, %s32
    %p164 = scmp.eq.s32.totalorder %s163, 0
    %s166 = sadd.s32 %s165, 1
    %s167 = scalar_select %p164, %s165, %s166
    %p170 = pneg %p164
    %p171 = scmp.eq.s32.totalorder %s13, 1
    %p172 = por %p170, %p171
    %p173 = scmp.ne.s32.totalorder %s165, %s168
    %p174 = scmp.eq.s32.totalorder %s13, 0
    %p175 = por %p173, %p174
    %p176 = scmp.ne.s32.totalorder %s165, %s168
    %p177 = scmp.eq.s32.totalorder %s18, 1
    %p178 = por %p176, %p177
    %p179 = scmp.ne.s32.totalorder %s168, %s169
    %p180 = scmp.eq.s32.totalorder %s18, 0
    %p181 = por %p179, %p180
    %p182 = scmp.ne.s32.totalorder %s168, %s169
    %p183 = scmp.eq.s32.totalorder %s19, 1
    %p184 = por %p182, %p183
    %p186 = scmp.ne.s32.totalorder %s169, %s185
    %p187 = scmp.eq.s32.totalorder %s19, 0
    %p188 = por %p186, %p187
    %s189 = ssub.s32 %s20, %s32
    %p190 = scmp.eq.s32.totalorder %s189, 0
    %s192 = sadd.s32 %s191, 1
    %s193 = scalar_select %p190, %s191, %s192
    %p196 = pneg %p190
    %p197 = scmp.eq.s32.totalorder %s13, 1
    %p198 = por %p196, %p197
    %p199 = scmp.ne.s32.totalorder %s191, %s194
    %p200 = scmp.eq.s32.totalorder %s13, 0
    %p201 = por %p199, %p200
    %p202 = scmp.ne.s32.totalorder %s191, %s194
    %p203 = scmp.eq.s32.totalorder %s18, 1
    %p204 = por %p202, %p203
    %p205 = scmp.ne.s32.totalorder %s194, %s195
    %p206 = scmp.eq.s32.totalorder %s18, 0
    %p207 = por %p205, %p206
    %p208 = scmp.ne.s32.totalorder %s194, %s195
    %p209 = scmp.eq.s32.totalorder %s19, 1
    %p210 = por %p208, %p209
    %p212 = scmp.ne.s32.totalorder %s195, %s211
    %p213 = scmp.eq.s32.totalorder %s19, 0
    %p214 = por %p212, %p213
    %s215 = ssub.s32 %s20, %s32
    %s216 = ssub.s32 %s21, %s28
    %s217 = sor.u32 %s215, %s216
    %p218 = scmp.eq.s32.totalorder %s217, 0
    %s220 = sadd.s32 %s219, 1
    %s221 = scalar_select %p218, %s219, %s220
    %p224 = pneg %p218
    %p225 = scmp.eq.s32.totalorder %s13, 1
    %p226 = por %p224, %p225
    %p227 = scmp.ne.s32.totalorder %s219, %s222
    %p228 = scmp.eq.s32.totalorder %s13, 0
    %p229 = por %p227, %p228
    %p230 = scmp.ne.s32.totalorder %s219, %s222
    %p231 = scmp.eq.s32.totalorder %s18, 1
    %p232 = por %p230, %p231
    %p233 = scmp.ne.s32.totalorder %s222, %s223
    %p234 = scmp.eq.s32.totalorder %s18, 0
    %p235 = por %p233, %p234
    %p236 = scmp.ne.s32.totalorder %s222, %s223
    %p237 = scmp.eq.s32.totalorder %s19, 1
    %p238 = por %p236, %p237
    %p240 = scmp.ne.s32.totalorder %s223, %s239
    %p241 = scmp.eq.s32.totalorder %s19, 0
    %p242 = por %p240, %p241
    %p243 = scmp.le.s32.totalorder 1, %s13
    %p244 = scmp.lt.s32.totalorder %s13, 3
    %p245 = pnand %p243, %p244
    %p246 = pneg %p245
    // Predicated region
    $region9: #{quantile_critics_forward.1} parent=5 // pred_check
      _
    $region10: #{quantile_critics_forward.1} parent=5 // pred_check_branch
      %248 = sbr.rel (%p245) target = $region12
    $region11: #{quantile_critics_forward.1} parent=5 // pred_region
      %s249 = ssub.s32 %s13, 1
      // Predicated region
      $region13: #{quantile_critics_forward.1} parent=11 // pred_check
        %p250 = pneg %p51
      $region14: #{quantile_critics_forward.1} parent=11 // pred_check_branch
        %252 = sbr.rel (%p250) target = $region16
      $region15: #{quantile_critics_forward.1} parent=11 // pred_region
        %p253 = scmp.lt.s32.totalorder %s23, 0
        %s254 = scalar_select %p253, %s23, 0
        %s255 = scalar_lea.vmem %s0, %s254
      $region16: #{quantile_critics_forward.1} parent=11 // pred_fallthru
        _
      // Predicated region
      $region17: #{quantile_critics_forward.1} parent=11 // pred_check
        %p256 = pneg %p77
      $region18: #{quantile_critics_forward.1} parent=11 // pred_check_branch
        %258 = sbr.rel (%p256) target = $region20
      $region19: #{quantile_critics_forward.1} parent=11 // pred_region
        %p259 = scmp.lt.s32.totalorder %s23, 0
        %s260 = scalar_select %p259, %s23, 0
        %s261 = scalar_lea.vmem %s1, %s260
      $region20: #{quantile_critics_forward.1} parent=11 // pred_fallthru
        _
    $region12: #{quantile_critics_forward.1} parent=5 // pred_fallthru
      _
    %p262 = scmp.lt.s32.totalorder %s13, 2
    // Predicated region
    $region21: #{quantile_critics_forward.1} parent=5 // pred_check
      %p263 = pneg %p262
    $region22: #{quantile_critics_forward.1} parent=5 // pred_check_branch
      %265 = sbr.rel (%p263) target = $region24
    $region23: #{quantile_critics_forward.1} parent=5 // pred_region
      // Predicated region
      $region25: #{quantile_critics_forward.1} parent=23 // pred_check
        %p266 = pneg %p97
      $region26: #{quantile_critics_forward.1} parent=23 // pred_check_branch
        %268 = sbr.rel (%p266) target = $region28
      $region27: #{quantile_critics_forward.1} parent=23 // pred_region
        %p269 = scmp.lt.s32.totalorder %s20, 1
        %s270 = scalar_select %p269, %s20, 1
        %s271 = smul.addr %s270, 4
        %s272 = smul.addr %s271, 4
        %s273 = scalar_lea.vmem %s2, %s272
      $region28: #{quantile_critics_forward.1} parent=23 // pred_fallthru
        _
      // Predicated region
      $region29: #{quantile_critics_forward.1} parent=23 // pred_check
        %p274 = pneg %p123
      $region30: #{quantile_critics_forward.1} parent=23 // pred_check_branch
        %276 = sbr.rel (%p274) target = $region32
      $region31: #{quantile_critics_forward.1} parent=23 // pred_region
        %p277 = scmp.lt.s32.totalorder %s20, 1
        %s278 = scalar_select %p277, %s20, 1
        %s279 = smul.addr %s278, 4
        %s280 = smul.addr %s279, 2
        %s281 = scalar_lea.vmem %s3, %s280
      $region32: #{quantile_critics_forward.1} parent=23 // pred_fallthru
        _
      // Predicated region
      $region33: #{quantile_critics_forward.1} parent=23 // pred_check
        %p282 = pneg %p149
      $region34: #{quantile_critics_forward.1} parent=23 // pred_check_branch
        %284 = sbr.rel (%p282) target = $region36
      $region35: #{quantile_critics_forward.1} parent=23 // pred_region
        %p285 = scmp.lt.s32.totalorder %s20, 1
        %s286 = scalar_select %p285, %s20, 1
        %s287 = smul.addr %s286, 256
        %s288 = smul.addr %s287, 4
        %s289 = scalar_lea.vmem %s4, %s288
      $region36: #{quantile_critics_forward.1} parent=23 // pred_fallthru
        _
      // Predicated region
      $region37: #{quantile_critics_forward.1} parent=23 // pred_check
        %p290 = pneg %p175
      $region38: #{quantile_critics_forward.1} parent=23 // pred_check_branch
        %292 = sbr.rel (%p290) target = $region40
      $region39: #{quantile_critics_forward.1} parent=23 // pred_region
        %p293 = scmp.lt.s32.totalorder %s20, 1
        %s294 = scalar_select %p293, %s20, 1
        %s295 = smul.addr %s294, 64
        %s296 = smul.addr %s295, 4
        %s297 = scalar_lea.vmem %s5, %s296
      $region40: #{quantile_critics_forward.1} parent=23 // pred_fallthru
        _
      // Predicated region
      $region41: #{quantile_critics_forward.1} parent=23 // pred_check
        %p298 = pneg %p201
      $region42: #{quantile_critics_forward.1} parent=23 // pred_check_branch
        %300 = sbr.rel (%p298) target = $region44
      $region43: #{quantile_critics_forward.1} parent=23 // pred_region
        %p301 = scmp.lt.s32.totalorder %s20, 1
        %s302 = scalar_select %p301, %s20, 1
        %s303 = smul.addr %s302, 4
        %s304 = smul.addr %s303, 4
        %s305 = scalar_lea.vmem %s6, %s304
      $region44: #{quantile_critics_forward.1} parent=23 // pred_fallthru
        _
    $region24: #{quantile_critics_forward.1} parent=5 // pred_fallthru
      _
    %p306 = scmp.le.s32.totalorder 1, %s13
    %p307 = scmp.lt.s32.totalorder %s13, 3
    %p308 = pnand %p306, %p307
    %p309 = pneg %p308
    // Predicated region
    $region45: #{quantile_critics_forward.1} parent=5 // pred_check
      _
    $region46: #{quantile_critics_forward.1} parent=5 // pred_check_branch
      %311 = sbr.rel (%p308) target = $region48
    $region47: #{quantile_critics_forward.1} parent=5 // pred_region
      %s312 = ssub.s32 %s13, 1
      %p313 = scmp.lt.s32.totalorder %s23, 0
      %s314 = scalar_select %p313, %s23, 0
      %s315 = scalar_lea.vmem %s0, %s314
      %p316 = pneg %p51
      %p317 = pneg %p48
      %p318 = scmp.lt.s32.totalorder %s23, 0
      %s319 = scalar_select %p318, %s23, 0
      %s320 = scalar_lea.vmem %s1, %s319
      %p321 = pneg %p77
      %p322 = pneg %p74
      %p323 = scmp.lt.s32.totalorder %s22, 1
      %s324 = scalar_select %p323, %s22, 1
      %s325 = smul.addr %s324, 4
      %s326 = smul.addr %s325, 4
      %s327 = scalar_lea.vmem %s2, %s326
      %p328 = pneg %p103
      %p329 = pneg %p100
      %p330 = scmp.lt.s32.totalorder %s22, 1
      %s331 = scalar_select %p330, %s22, 1
      %s332 = smul.addr %s331, 4
      %s333 = smul.addr %s332, 2
      %s334 = scalar_lea.vmem %s3, %s333
      %p335 = pneg %p129
      %p336 = pneg %p126
      %p337 = scmp.lt.s32.totalorder %s22, 1
      %s338 = scalar_select %p337, %s22, 1
      %s339 = smul.addr %s338, 256
      %s340 = smul.addr %s339, 4
      %s341 = scalar_lea.vmem %s4, %s340
      %p342 = pneg %p155
      %p343 = pneg %p152
      %p344 = scmp.lt.s32.totalorder %s22, 1
      %s345 = scalar_select %p344, %s22, 1
      %s346 = smul.addr %s345, 64
      %s347 = smul.addr %s346, 4
      %s348 = scalar_lea.vmem %s5, %s347
      %p349 = pneg %p181
      %p350 = pneg %p178
      %p351 = scmp.lt.s32.totalorder %s22, 1
      %s352 = scalar_select %p351, %s22, 1
      %s353 = smul.addr %s352, 4
      %s354 = smul.addr %s353, 4
      %s355 = scalar_lea.vmem %s6, %s354
      %p356 = pneg %p207
      %p357 = pneg %p204
      %p358 = pneg %p235
      %p359 = pneg %p232
      %p360 = scmp.lt.s32.totalorder %s22, 1
      %s361 = scalar_select %p360, %s22, 1
      %p362 = scmp.lt.s32.totalorder %s23, 0
      %s363 = scalar_select %p362, %s23, 0
      %s364 = sadd.s32 %s363, %s361
      %s365 = smul.addr %s364, 2
      %s366 = scalar_lea.vmem %s7, %s365
      %p367 = scmp.lt.s32.totalorder %s23, 0
      %s368 = scalar_select %p367, %s23, 0
      %s369 = scalar_lea.vmem %s0, %s368
      %p370 = scmp.lt.s32.totalorder %s23, 0
      %s371 = scalar_select %p370, %s23, 0
      %s372 = scalar_lea.vmem %s1, %s371
      %p373 = scmp.lt.s32.totalorder %s22, 1
      %s374 = scalar_select %p373, %s22, 1
      %s375 = smul.addr %s374, 4
      %s376 = smul.addr %s375, 4
      %s377 = scalar_lea.vmem %s2, %s376
      %p378 = scmp.lt.s32.totalorder %s22, 1
      %s379 = scalar_select %p378, %s22, 1
      %s380 = smul.addr %s379, 4
      %s381 = smul.addr %s380, 2
      %s382 = scalar_lea.vmem %s3, %s381
      %p383 = scmp.lt.s32.totalorder %s22, 1
      %s384 = scalar_select %p383, %s22, 1
      %s385 = smul.addr %s384, 256
      %s386 = smul.addr %s385, 4
      %s387 = scalar_lea.vmem %s4, %s386
      %p388 = scmp.lt.s32.totalorder %s22, 1
      %s389 = scalar_select %p388, %s22, 1
      %s390 = smul.addr %s389, 64
      %s391 = smul.addr %s390, 4
      %s392 = scalar_lea.vmem %s5, %s391
      %p393 = scmp.lt.s32.totalorder %s22, 1
      %s394 = scalar_select %p393, %s22, 1
      %s395 = smul.addr %s394, 4
      %s396 = smul.addr %s395, 4
      %s397 = scalar_lea.vmem %s6, %s396
      %p398 = scmp.lt.s32.totalorder %s22, 1
      %s399 = scalar_select %p398, %s22, 1
      %p400 = scmp.lt.s32.totalorder %s23, 0
      %s401 = scalar_select %p400, %s23, 0
      %s402 = sadd.s32 %s401, %s399
      %s403 = smul.addr %s402, 2
      %s404 = scalar_lea.vmem %s7, %s403
      %v406 = vld [vmem:[%s369] sm:$0x1]
      %v407 = vld [vmem:[%s377] sm:$0xff]
      %v408 = vld [vmem:[%s377 + $0x8] sm:$0xff]
      %v409 = vld [vmem:[%s372] sm:$0x1]
      %v410 = vld [vmem:[%s382] sm:$0xff]
      %412 = vst [vmem:[#allocation1] ss:$4 sm:$0xff] %v410
      %v413 = vld.sshfl [vmem:[#allocation1] sm:$0xff pattern:$0x73625140]
      %v414 = vld.sshfl [vmem:[#allocation1 + $0x8] sm:$0xff pattern:$0x73625140]
      %v415 = vld.sshfl [vmem:[#allocation1 + $0x10] sm:$0xff pattern:$0x73625140]
      %v416 = vld.sshfl [vmem:[#allocation1 + $0x18] sm:$0xff pattern:$0x73625140]
      %vm417 = vcmask 31744
      %v419 = vsel %vm417, %v409, 0
      %vm421 = vcmask 1041408
      %v422 = vsel %vm421, %v413, 0
      %v424 = vsel %vm421, %v414, 0
      %v426 = vsel %vm421, %v415, 0
      %v428 = vsel %vm421, %v416, 0
      %430 = vmatpush.bf16.msra.mxu0 0
      %431 = vmatpush.bf16.msra.mxu0 0
      %432 = vmatpush.bf16.msra.mxu0 0
      %433 = vmatpush.bf16.msra.mxu0 0
      %434 = vmatpush.bf16.msra.mxu0 0
      %435 = vmatpush.bf16.msra.mxu0 0
      %436 = vmatpush.bf16.msra.mxu0 0
      %437 = vmatpush.bf16.msra.mxu0 %v422
      %438 = vmatmul.bf16.gmra.mxu0 %v419
      %v439 = vpop.f32.mrf.mxu0
      %v440 = vadd.f32 0.0, %v439
      %v441 = vpop.f32.mrf.mxu0
      %442 = vdwg.mxu0
      %443 = vmatpush.bf16.msra.mxu0 0
      %444 = vmatpush.bf16.msra.mxu0 0
      %445 = vmatpush.bf16.msra.mxu0 0
      %446 = vmatpush.bf16.msra.mxu0 0
      %447 = vmatpush.bf16.msra.mxu0 0
      %448 = vmatpush.bf16.msra.mxu0 0
      %449 = vmatpush.bf16.msra.mxu0 0
      %450 = vmatpush.bf16.msra.mxu0 %v424
      %451 = vmatmul.bf16.gmra.mxu0 %v419
      %v452 = vpop.f32.mrf.mxu0
      %v453 = vadd.f32 0.0, %v452
      %v454 = vpop.f32.mrf.mxu0
      %455 = vdwg.mxu0
      %456 = vmatpush.bf16.msra.mxu0 0
      %457 = vmatpush.bf16.msra.mxu0 0
      %458 = vmatpush.bf16.msra.mxu0 0
      %459 = vmatpush.bf16.msra.mxu0 0
      %460 = vmatpush.bf16.msra.mxu0 0
      %461 = vmatpush.bf16.msra.mxu0 0
      %462 = vmatpush.bf16.msra.mxu0 0
      %463 = vmatpush.bf16.msra.mxu0 %v426
      %464 = vmatmul.bf16.gmra.mxu0 %v419
      %v465 = vpop.f32.mrf.mxu0
      %v466 = vadd.f32 0.0, %v465
      %v467 = vpop.f32.mrf.mxu0
      %468 = vdwg.mxu0
      %469 = vmatpush.bf16.msra.mxu0 0
      %470 = vmatpush.bf16.msra.mxu0 0
      %471 = vmatpush.bf16.msra.mxu0 0
      %472 = vmatpush.bf16.msra.mxu0 0
      %473 = vmatpush.bf16.msra.mxu0 0
      %474 = vmatpush.bf16.msra.mxu0 0
      %475 = vmatpush.bf16.msra.mxu0 0
      %476 = vmatpush.bf16.msra.mxu0 %v428
      %477 = vmatmul.bf16.gmra.mxu0 %v419
      %v478 = vpop.f32.mrf.mxu0
      %v479 = vadd.f32 0.0, %v478
      %v480 = vpop.f32.mrf.mxu0
      %481 = vdwg.mxu0
      %v484 = vunpack.c.l.b16 %v407
      %v485 = vunpack.c.h.b16 %v407
      %v486 = vunpack.c.l.b16 %v408
      %v487 = vunpack.c.h.b16 %v408
      %v488 = vpack.c.b16 %v484, %v484
      %v489 = vpack.c.b16 %v485, %v485
      %v490 = vpack.c.b16 %v486, %v486
      %v491 = vpack.c.b16 %v487, %v487
      %vm492 = vcmask 64512
      %v494 = vsel %vm492, %v406, 0
      %vm496 = vcmask 1043456
      %v498 = vsel %vm496, %v488, 0
      %v501 = vsel %vm496, %v489, 0
      %v504 = vsel %vm496, %v490, 0
      %v507 = vsel %vm496, %v491, 0
      %509 = vmatpush.bf16.msra.mxu0 0
      %510 = vmatpush.bf16.msra.mxu0 0
      %511 = vmatpush.bf16.msra.mxu0 0
      %512 = vmatpush.bf16.msra.mxu0 0
      %513 = vmatpush.bf16.msra.mxu0 0
      %514 = vmatpush.bf16.msra.mxu0 0
      %515 = vmatpush.bf16.msra.mxu0 0
      %516 = vmatpush.bf16.msra.mxu0 %v498
      %517 = vmatmul.bf16.gmra.mxu0 %v494
      %v518 = vpop.f32.mrf.mxu0
      %v519 = vadd.f32 %v440, %v518
      %v520 = vpop.f32.mrf.mxu0
      %521 = vdwg.mxu0
      %522 = vmatpush.bf16.msra.mxu0 0
      %523 = vmatpush.bf16.msra.mxu0 0
      %524 = vmatpush.bf16.msra.mxu0 0
      %525 = vmatpush.bf16.msra.mxu0 0
      %526 = vmatpush.bf16.msra.mxu0 0
      %527 = vmatpush.bf16.msra.mxu0 0
      %528 = vmatpush.bf16.msra.mxu0 0
      %529 = vmatpush.bf16.msra.mxu0 %v501
      %530 = vmatmul.bf16.gmra.mxu0 %v494
      %v531 = vpop.f32.mrf.mxu0
      %v532 = vadd.f32 %v453, %v531
      %v533 = vpop.f32.mrf.mxu0
      %534 = vdwg.mxu0
      %535 = vmatpush.bf16.msra.mxu0 0
      %536 = vmatpush.bf16.msra.mxu0 0
      %537 = vmatpush.bf16.msra.mxu0 0
      %538 = vmatpush.bf16.msra.mxu0 0
      %539 = vmatpush.bf16.msra.mxu0 0
      %540 = vmatpush.bf16.msra.mxu0 0
      %541 = vmatpush.bf16.msra.mxu0 0
      %542 = vmatpush.bf16.msra.mxu0 %v504
      %543 = vmatmul.bf16.gmra.mxu0 %v494
      %v544 = vpop.f32.mrf.mxu0
      %v545 = vadd.f32 %v466, %v544
      %v546 = vpop.f32.mrf.mxu0
      %547 = vdwg.mxu0
      %548 = vmatpush.bf16.msra.mxu0 0
      %549 = vmatpush.bf16.msra.mxu0 0
      %550 = vmatpush.bf16.msra.mxu0 0
      %551 = vmatpush.bf16.msra.mxu0 0
      %552 = vmatpush.bf16.msra.mxu0 0
      %553 = vmatpush.bf16.msra.mxu0 0
      %554 = vmatpush.bf16.msra.mxu0 0
      %555 = vmatpush.bf16.msra.mxu0 %v507
      %556 = vmatmul.bf16.gmra.mxu0 %v494
      %v557 = vpop.f32.mrf.mxu0
      %v558 = vadd.f32 %v479, %v557
      %v559 = vpop.f32.mrf.mxu0
      %560 = vdwg.mxu0
      %v561 = vld [vmem:[%s397] ss:$4 sm:$0xf]
      %v563 = vperm.slane %v561, 0
      %v564 = vperm.slane %v561, 1
      %v565 = vperm.slane %v561, 2
      %v566 = vperm.slane %v561, 3
      %v571 = vadd.f32 %v519, %v563
      %v572 = vadd.f32 %v532, %v564
      %v573 = vadd.f32 %v545, %v565
      %v574 = vadd.f32 %v558, %v566
      %v575 = vmax.f32 %v571, 0.0
      %v576 = vmax.f32 %v572, 0.0
      %v577 = vmax.f32 %v573, 0.0
      %v578 = vmax.f32 %v574, 0.0
      %v579 = vpack.c.bf16 %v575, %v575
      %v580 = vpack.c.bf16 %v576, %v576
      %v581 = vpack.c.bf16 %v577, %v577
      %v582 = vpack.c.bf16 %v578, %v578
      %v583 = vld [vmem:[%s387] sm:$0xff]
      %v584 = vld [vmem:[%s387 + $0x8] sm:$0xff]
      %v585 = vld [vmem:[%s387 + $0x10] sm:$0xff]
      %v586 = vld [vmem:[%s387 + $0x18] sm:$0xff]
      %v587 = vld [vmem:[%s387 + $0x20] sm:$0xff]
      %v588 = vld [vmem:[%s387 + $0x28] sm:$0xff]
      %v589 = vld [vmem:[%s387 + $0x30] sm:$0xff]
      %v590 = vld [vmem:[%s387 + $0x38] sm:$0xff]
      %v591 = vld [vmem:[%s387 + $0x40] sm:$0xff]
      %v592 = vld [vmem:[%s387 + $0x48] sm:$0xff]
      %v593 = vld [vmem:[%s387 + $0x50] sm:$0xff]
      %v594 = vld [vmem:[%s387 + $0x58] sm:$0xff]
      %v595 = vld [vmem:[%s387 + $0x60] sm:$0xff]
      %v596 = vld [vmem:[%s387 + $0x68] sm:$0xff]
      %v597 = vld [vmem:[%s387 + $0x70] sm:$0xff]
      %v598 = vld [vmem:[%s387 + $0x78] sm:$0xff]
      %v599 = vld [vmem:[%s387 + $0x80] sm:$0xff]
      %v600 = vld [vmem:[%s387 + $0x88] sm:$0xff]
      %v601 = vld [vmem:[%s387 + $0x90] sm:$0xff]
      %v602 = vld [vmem:[%s387 + $0x98] sm:$0xff]
      %v603 = vld [vmem:[%s387 + $0xa0] sm:$0xff]
      %v604 = vld [vmem:[%s387 + $0xa8] sm:$0xff]
      %v605 = vld [vmem:[%s387 + $0xb0] sm:$0xff]
      %v606 = vld [vmem:[%s387 + $0xb8] sm:$0xff]
      %v607 = vld [vmem:[%s387 + $0xc0] sm:$0xff]
      %v608 = vld [vmem:[%s387 + $0xc8] sm:$0xff]
      %v609 = vld [vmem:[%s387 + $0xd0] sm:$0xff]
      %v610 = vld [vmem:[%s387 + $0xd8] sm:$0xff]
      %v611 = vld [vmem:[%s387 + $0xe0] sm:$0xff]
      %v612 = vld [vmem:[%s387 + $0xe8] sm:$0xff]
      %v613 = vld [vmem:[%s387 + $0xf0] sm:$0xff]
      %v614 = vld [vmem:[%s387 + $0xf8] sm:$0xff]
      %v615 = vld [vmem:[%s387 + $0x100] sm:$0xff]
      %v616 = vld [vmem:[%s387 + $0x108] sm:$0xff]
      %v617 = vld [vmem:[%s387 + $0x110] sm:$0xff]
      %v618 = vld [vmem:[%s387 + $0x118] sm:$0xff]
      %v619 = vld [vmem:[%s387 + $0x120] sm:$0xff]
      %v620 = vld [vmem:[%s387 + $0x128] sm:$0xff]
      %v621 = vld [vmem:[%s387 + $0x130] sm:$0xff]
      %v622 = vld [vmem:[%s387 + $0x138] sm:$0xff]
      %v623 = vld [vmem:[%s387 + $0x140] sm:$0xff]
      %v624 = vld [vmem:[%s387 + $0x148] sm:$0xff]
      %v625 = vld [vmem:[%s387 + $0x150] sm:$0xff]
      %v626 = vld [vmem:[%s387 + $0x158] sm:$0xff]
      %v627 = vld [vmem:[%s387 + $0x160] sm:$0xff]
      %v628 = vld [vmem:[%s387 + $0x168] sm:$0xff]
      %v629 = vld [vmem:[%s387 + $0x170] sm:$0xff]
      %v630 = vld [vmem:[%s387 + $0x178] sm:$0xff]
      %v631 = vld [vmem:[%s387 + $0x180] sm:$0xff]
      %v632 = vld [vmem:[%s387 + $0x188] sm:$0xff]
      %v633 = vld [vmem:[%s387 + $0x190] sm:$0xff]
      %v634 = vld [vmem:[%s387 + $0x198] sm:$0xff]
      %v635 = vld [vmem:[%s387 + $0x1a0] sm:$0xff]
      %v636 = vld [vmem:[%s387 + $0x1a8] sm:$0xff]
      %v637 = vld [vmem:[%s387 + $0x1b0] sm:$0xff]
      %v638 = vld [vmem:[%s387 + $0x1b8] sm:$0xff]
      %v639 = vld [vmem:[%s387 + $0x1c0] sm:$0xff]
      %v640 = vld [vmem:[%s387 + $0x1c8] sm:$0xff]
      %v641 = vld [vmem:[%s387 + $0x1d0] sm:$0xff]
      %v642 = vld [vmem:[%s387 + $0x1d8] sm:$0xff]
      %v643 = vld [vmem:[%s387 + $0x1e0] sm:$0xff]
      %v644 = vld [vmem:[%s387 + $0x1e8] sm:$0xff]
      %v645 = vld [vmem:[%s387 + $0x1f0] sm:$0xff]
      %v646 = vld [vmem:[%s387 + $0x1f8] sm:$0xff]
      %v647 = vld [vmem:[%s387 + $0x200] sm:$0xff]
      %v648 = vld [vmem:[%s387 + $0x208] sm:$0xff]
      %v649 = vld [vmem:[%s387 + $0x210] sm:$0xff]
      %v650 = vld [vmem:[%s387 + $0x218] sm:$0xff]
      %v651 = vld [vmem:[%s387 + $0x220] sm:$0xff]
      %v652 = vld [vmem:[%s387 + $0x228] sm:$0xff]
      %v653 = vld [vmem:[%s387 + $0x230] sm:$0xff]
      %v654 = vld [vmem:[%s387 + $0x238] sm:$0xff]
      %v655 = vld [vmem:[%s387 + $0x240] sm:$0xff]
      %v656 = vld [vmem:[%s387 + $0x248] sm:$0xff]
      %v657 = vld [vmem:[%s387 + $0x250] sm:$0xff]
      %v658 = vld [vmem:[%s387 + $0x258] sm:$0xff]
      %v659 = vld [vmem:[%s387 + $0x260] sm:$0xff]
      %v660 = vld [vmem:[%s387 + $0x268] sm:$0xff]
      %v661 = vld [vmem:[%s387 + $0x270] sm:$0xff]
      %v662 = vld [vmem:[%s387 + $0x278] sm:$0xff]
      %v663 = vld [vmem:[%s387 + $0x280] sm:$0xff]
      %v664 = vld [vmem:[%s387 + $0x288] sm:$0xff]
      %v665 = vld [vmem:[%s387 + $0x290] sm:$0xff]
      %v666 = vld [vmem:[%s387 + $0x298] sm:$0xff]
      %v667 = vld [vmem:[%s387 + $0x2a0] sm:$0xff]
      %v668 = vld [vmem:[%s387 + $0x2a8] sm:$0xff]
      %v669 = vld [vmem:[%s387 + $0x2b0] sm:$0xff]
      %v670 = vld [vmem:[%s387 + $0x2b8] sm:$0xff]
      %v671 = vld [vmem:[%s387 + $0x2c0] sm:$0xff]
      %v672 = vld [vmem:[%s387 + $0x2c8] sm:$0xff]
      %v673 = vld [vmem:[%s387 + $0x2d0] sm:$0xff]
      %v674 = vld [vmem:[%s387 + $0x2d8] sm:$0xff]
      %v675 = vld [vmem:[%s387 + $0x2e0] sm:$0xff]
      %v676 = vld [vmem:[%s387 + $0x2e8] sm:$0xff]
      %v677 = vld [vmem:[%s387 + $0x2f0] sm:$0xff]
      %v678 = vld [vmem:[%s387 + $0x2f8] sm:$0xff]
      %v679 = vld [vmem:[%s387 + $0x300] sm:$0xff]
      %v680 = vld [vmem:[%s387 + $0x308] sm:$0xff]
      %v681 = vld [vmem:[%s387 + $0x310] sm:$0xff]
      %v682 = vld [vmem:[%s387 + $0x318] sm:$0xff]
      %v683 = vld [vmem:[%s387 + $0x320] sm:$0xff]
      %v684 = vld [vmem:[%s387 + $0x328] sm:$0xff]
      %v685 = vld [vmem:[%s387 + $0x330] sm:$0xff]
      %v686 = vld [vmem:[%s387 + $0x338] sm:$0xff]
      %v687 = vld [vmem:[%s387 + $0x340] sm:$0xff]
      %v688 = vld [vmem:[%s387 + $0x348] sm:$0xff]
      %v689 = vld [vmem:[%s387 + $0x350] sm:$0xff]
      %v690 = vld [vmem:[%s387 + $0x358] sm:$0xff]
      %v691 = vld [vmem:[%s387 + $0x360] sm:$0xff]
      %v692 = vld [vmem:[%s387 + $0x368] sm:$0xff]
      %v693 = vld [vmem:[%s387 + $0x370] sm:$0xff]
      %v694 = vld [vmem:[%s387 + $0x378] sm:$0xff]
      %v695 = vld [vmem:[%s387 + $0x380] sm:$0xff]
      %v696 = vld [vmem:[%s387 + $0x388] sm:$0xff]
      %v697 = vld [vmem:[%s387 + $0x390] sm:$0xff]
      %v698 = vld [vmem:[%s387 + $0x398] sm:$0xff]
      %v699 = vld [vmem:[%s387 + $0x3a0] sm:$0xff]
      %v700 = vld [vmem:[%s387 + $0x3a8] sm:$0xff]
      %v701 = vld [vmem:[%s387 + $0x3b0] sm:$0xff]
      %v702 = vld [vmem:[%s387 + $0x3b8] sm:$0xff]
      %v703 = vld [vmem:[%s387 + $0x3c0] sm:$0xff]
      %v704 = vld [vmem:[%s387 + $0x3c8] sm:$0xff]
      %v705 = vld [vmem:[%s387 + $0x3d0] sm:$0xff]
      %v706 = vld [vmem:[%s387 + $0x3d8] sm:$0xff]
      %v707 = vld [vmem:[%s387 + $0x3e0] sm:$0xff]
      %v708 = vld [vmem:[%s387 + $0x3e8] sm:$0xff]
      %v709 = vld [vmem:[%s387 + $0x3f0] sm:$0xff]
      %v710 = vld [vmem:[%s387 + $0x3f8] sm:$0xff]
      %s711 = scalar_lea.vmem %s397, 1
      %v712 = vld [vmem:[%s711] ss:$4 sm:$0xf]
      %v714 = vperm.slane %v712, 0
      %v715 = vperm.slane %v712, 1
      %v716 = vperm.slane %v712, 2
      %v717 = vperm.slane %v712, 3
      %v850 = vunpack.c.l.b16 %v583
      %v851 = vunpack.c.h.b16 %v583
      %v852 = vunpack.c.l.b16 %v584
      %v853 = vunpack.c.h.b16 %v584
      %v854 = vunpack.c.l.b16 %v585
      %v855 = vunpack.c.h.b16 %v585
      %v856 = vunpack.c.l.b16 %v586
      %v857 = vunpack.c.h.b16 %v586
      %v858 = vunpack.c.l.b16 %v587
      %v859 = vunpack.c.h.b16 %v587
      %v860 = vunpack.c.l.b16 %v588
      %v861 = vunpack.c.h.b16 %v588
      %v862 = vunpack.c.l.b16 %v589
      %v863 = vunpack.c.h.b16 %v589
      %v864 = vunpack.c.l.b16 %v590
      %v865 = vunpack.c.h.b16 %v590
      %v866 = vunpack.c.l.b16 %v591
      %v867 = vunpack.c.h.b16 %v591
      %v868 = vunpack.c.l.b16 %v592
      %v869 = vunpack.c.h.b16 %v592
      %v870 = vunpack.c.l.b16 %v593
      %v871 = vunpack.c.h.b16 %v593
      %v872 = vunpack.c.l.b16 %v594
      %v873 = vunpack.c.h.b16 %v594
      %v874 = vunpack.c.l.b16 %v595
      %v875 = vunpack.c.h.b16 %v595
      %v876 = vunpack.c.l.b16 %v596
      %v877 = vunpack.c.h.b16 %v596
      %v878 = vunpack.c.l.b16 %v597
      %v879 = vunpack.c.h.b16 %v597
      %v880 = vunpack.c.l.b16 %v598
      %v881 = vunpack.c.h.b16 %v598
      %v882 = vunpack.c.l.b16 %v599
      %v883 = vunpack.c.h.b16 %v599
      %v884 = vunpack.c.l.b16 %v600
      %v885 = vunpack.c.h.b16 %v600
      %v886 = vunpack.c.l.b16 %v601
      %v887 = vunpack.c.h.b16 %v601
      %v888 = vunpack.c.l.b16 %v602
      %v889 = vunpack.c.h.b16 %v602
      %v890 = vunpack.c.l.b16 %v603
      %v891 = vunpack.c.h.b16 %v603
      %v892 = vunpack.c.l.b16 %v604
      %v893 = vunpack.c.h.b16 %v604
      %v894 = vunpack.c.l.b16 %v605
      %v895 = vunpack.c.h.b16 %v605
      %v896 = vunpack.c.l.b16 %v606
      %v897 = vunpack.c.h.b16 %v606
      %v898 = vunpack.c.l.b16 %v607
      %v899 = vunpack.c.h.b16 %v607
      %v900 = vunpack.c.l.b16 %v608
      %v901 = vunpack.c.h.b16 %v608
      %v902 = vunpack.c.l.b16 %v609
      %v903 = vunpack.c.h.b16 %v609
      %v904 = vunpack.c.l.b16 %v610
      %v905 = vunpack.c.h.b16 %v610
      %v906 = vunpack.c.l.b16 %v611
      %v907 = vunpack.c.h.b16 %v611
      %v908 = vunpack.c.l.b16 %v612
      %v909 = vunpack.c.h.b16 %v612
      %v910 = vunpack.c.l.b16 %v613
      %v911 = vunpack.c.h.b16 %v613
      %v912 = vunpack.c.l.b16 %v614
      %v913 = vunpack.c.h.b16 %v614
      %v914 = vunpack.c.l.b16 %v615
      %v915 = vunpack.c.h.b16 %v615
      %v916 = vunpack.c.l.b16 %v616
      %v917 = vunpack.c.h.b16 %v616
      %v918 = vunpack.c.l.b16 %v617
      %v919 = vunpack.c.h.b16 %v617
      %v920 = vunpack.c.l.b16 %v618
      %v921 = vunpack.c.h.b16 %v618
      %v922 = vunpack.c.l.b16 %v619
      %v923 = vunpack.c.h.b16 %v619
      %v924 = vunpack.c.l.b16 %v620
      %v925 = vunpack.c.h.b16 %v620
      %v926 = vunpack.c.l.b16 %v621
      %v927 = vunpack.c.h.b16 %v621
      %v928 = vunpack.c.l.b16 %v622
      %v929 = vunpack.c.h.b16 %v622
      %v930 = vunpack.c.l.b16 %v623
      %v931 = vunpack.c.h.b16 %v623
      %v932 = vunpack.c.l.b16 %v624
      %v933 = vunpack.c.h.b16 %v624
      %v934 = vunpack.c.l.b16 %v625
      %v935 = vunpack.c.h.b16 %v625
      %v936 = vunpack.c.l.b16 %v626
      %v937 = vunpack.c.h.b16 %v626
      %v938 = vunpack.c.l.b16 %v627
      %v939 = vunpack.c.h.b16 %v627
      %v940 = vunpack.c.l.b16 %v628
      %v941 = vunpack.c.h.b16 %v628
      %v942 = vunpack.c.l.b16 %v629
      %v943 = vunpack.c.h.b16 %v629
      %v944 = vunpack.c.l.b16 %v630
      %v945 = vunpack.c.h.b16 %v630
      %v946 = vunpack.c.l.b16 %v631
      %v947 = vunpack.c.h.b16 %v631
      %v948 = vunpack.c.l.b16 %v632
      %v949 = vunpack.c.h.b16 %v632
      %v950 = vunpack.c.l.b16 %v633
      %v951 = vunpack.c.h.b16 %v633
      %v952 = vunpack.c.l.b16 %v634
      %v953 = vunpack.c.h.b16 %v634
      %v954 = vunpack.c.l.b16 %v635
      %v955 = vunpack.c.h.b16 %v635
      %v956 = vunpack.c.l.b16 %v636
      %v957 = vunpack.c.h.b16 %v636
      %v958 = vunpack.c.l.b16 %v637
      %v959 = vunpack.c.h.b16 %v637
      %v960 = vunpack.c.l.b16 %v638
      %v961 = vunpack.c.h.b16 %v638
      %v962 = vunpack.c.l.b16 %v639
      %v963 = vunpack.c.h.b16 %v639
      %v964 = vunpack.c.l.b16 %v640
      %v965 = vunpack.c.h.b16 %v640
      %v966 = vunpack.c.l.b16 %v641
      %v967 = vunpack.c.h.b16 %v641
      %v968 = vunpack.c.l.b16 %v642
      %v969 = vunpack.c.h.b16 %v642
      %v970 = vunpack.c.l.b16 %v643
      %v971 = vunpack.c.h.b16 %v643
      %v972 = vunpack.c.l.b16 %v644
      %v973 = vunpack.c.h.b16 %v644
      %v974 = vunpack.c.l.b16 %v645
      %v975 = vunpack.c.h.b16 %v645
      %v976 = vunpack.c.l.b16 %v646
      %v977 = vunpack.c.h.b16 %v646
      %v978 = vunpack.c.l.b16 %v647
      %v979 = vunpack.c.h.b16 %v647
      %v980 = vunpack.c.l.b16 %v648
      %v981 = vunpack.c.h.b16 %v648
      %v982 = vunpack.c.l.b16 %v649
      %v983 = vunpack.c.h.b16 %v649
      %v984 = vunpack.c.l.b16 %v650
      %v985 = vunpack.c.h.b16 %v650
      %v986 = vunpack.c.l.b16 %v651
      %v987 = vunpack.c.h.b16 %v651
      %v988 = vunpack.c.l.b16 %v652
      %v989 = vunpack.c.h.b16 %v652
      %v990 = vunpack.c.l.b16 %v653
      %v991 = vunpack.c.h.b16 %v653
      %v992 = vunpack.c.l.b16 %v654
      %v993 = vunpack.c.h.b16 %v654
      %v994 = vunpack.c.l.b16 %v655
      %v995 = vunpack.c.h.b16 %v655
      %v996 = vunpack.c.l.b16 %v656
      %v997 = vunpack.c.h.b16 %v656
      %v998 = vunpack.c.l.b16 %v657
      %v999 = vunpack.c.h.b16 %v657
      %v1000 = vunpack.c.l.b16 %v658
      %v1001 = vunpack.c.h.b16 %v658
      %v1002 = vunpack.c.l.b16 %v659
      %v1003 = vunpack.c.h.b16 %v659
      %v1004 = vunpack.c.l.b16 %v660
      %v1005 = vunpack.c.h.b16 %v660
      %v1006 = vunpack.c.l.b16 %v661
      %v1007 = vunpack.c.h.b16 %v661
      %v1008 = vunpack.c.l.b16 %v662
      %v1009 = vunpack.c.h.b16 %v662
      %v1010 = vunpack.c.l.b16 %v663
      %v1011 = vunpack.c.h.b16 %v663
      %v1012 = vunpack.c.l.b16 %v664
      %v1013 = vunpack.c.h.b16 %v664
      %v1014 = vunpack.c.l.b16 %v665
      %v1015 = vunpack.c.h.b16 %v665
      %v1016 = vunpack.c.l.b16 %v666
      %v1017 = vunpack.c.h.b16 %v666
      %v1018 = vunpack.c.l.b16 %v667
      %v1019 = vunpack.c.h.b16 %v667
      %v1020 = vunpack.c.l.b16 %v668
      %v1021 = vunpack.c.h.b16 %v668
      %v1022 = vunpack.c.l.b16 %v669
      %v1023 = vunpack.c.h.b16 %v669
      %v1024 = vunpack.c.l.b16 %v670
      %v1025 = vunpack.c.h.b16 %v670
      %v1026 = vunpack.c.l.b16 %v671
      %v1027 = vunpack.c.h.b16 %v671
      %v1028 = vunpack.c.l.b16 %v672
      %v1029 = vunpack.c.h.b16 %v672
      %v1030 = vunpack.c.l.b16 %v673
      %v1031 = vunpack.c.h.b16 %v673
      %v1032 = vunpack.c.l.b16 %v674
      %v1033 = vunpack.c.h.b16 %v674
      %v1034 = vunpack.c.l.b16 %v675
      %v1035 = vunpack.c.h.b16 %v675
      %v1036 = vunpack.c.l.b16 %v676
      %v1037 = vunpack.c.h.b16 %v676
      %v1038 = vunpack.c.l.b16 %v677
      %v1039 = vunpack.c.h.b16 %v677
      %v1040 = vunpack.c.l.b16 %v678
      %v1041 = vunpack.c.h.b16 %v678
      %v1042 = vunpack.c.l.b16 %v679
      %v1043 = vunpack.c.h.b16 %v679
      %v1044 = vunpack.c.l.b16 %v680
      %v1045 = vunpack.c.h.b16 %v680
      %v1046 = vunpack.c.l.b16 %v681
      %v1047 = vunpack.c.h.b16 %v681
      %v1048 = vunpack.c.l.b16 %v682
      %v1049 = vunpack.c.h.b16 %v682
      %v1050 = vunpack.c.l.b16 %v683
      %v1051 = vunpack.c.h.b16 %v683
      %v1052 = vunpack.c.l.b16 %v684
      %v1053 = vunpack.c.h.b16 %v684
      %v1054 = vunpack.c.l.b16 %v685
      %v1055 = vunpack.c.h.b16 %v685
      %v1056 = vunpack.c.l.b16 %v686
      %v1057 = vunpack.c.h.b16 %v686
      %v1058 = vunpack.c.l.b16 %v687
      %v1059 = vunpack.c.h.b16 %v687
      %v1060 = vunpack.c.l.b16 %v688
      %v1061 = vunpack.c.h.b16 %v688
      %v1062 = vunpack.c.l.b16 %v689
      %v1063 = vunpack.c.h.b16 %v689
      %v1064 = vunpack.c.l.b16 %v690
      %v1065 = vunpack.c.h.b16 %v690
      %v1066 = vunpack.c.l.b16 %v691
      %v1067 = vunpack.c.h.b16 %v691
      %v1068 = vunpack.c.l.b16 %v692
      %v1069 = vunpack.c.h.b16 %v692
      %v1070 = vunpack.c.l.b16 %v693
      %v1071 = vunpack.c.h.b16 %v693
      %v1072 = vunpack.c.l.b16 %v694
      %v1073 = vunpack.c.h.b16 %v694
      %v1074 = vunpack.c.l.b16 %v695
      %v1075 = vunpack.c.h.b16 %v695
      %v1076 = vunpack.c.l.b16 %v696
      %v1077 = vunpack.c.h.b16 %v696
      %v1078 = vunpack.c.l.b16 %v697
      %v1079 = vunpack.c.h.b16 %v697
      %v1080 = vunpack.c.l.b16 %v698
      %v1081 = vunpack.c.h.b16 %v698
      %v1082 = vunpack.c.l.b16 %v699
      %v1083 = vunpack.c.h.b16 %v699
      %v1084 = vunpack.c.l.b16 %v700
      %v1085 = vunpack.c.h.b16 %v700
      %v1086 = vunpack.c.l.b16 %v701
      %v1087 = vunpack.c.h.b16 %v701
      %v1088 = vunpack.c.l.b16 %v702
      %v1089 = vunpack.c.h.b16 %v702
      %v1090 = vunpack.c.l.b16 %v703
      %v1091 = vunpack.c.h.b16 %v703
      %v1092 = vunpack.c.l.b16 %v704
      %v1093 = vunpack.c.h.b16 %v704
      %v1094 = vunpack.c.l.b16 %v705
      %v1095 = vunpack.c.h.b16 %v705
      %v1096 = vunpack.c.l.b16 %v706
      %v1097 = vunpack.c.h.b16 %v706
      %v1098 = vunpack.c.l.b16 %v707
      %v1099 = vunpack.c.h.b16 %v707
      %v1100 = vunpack.c.l.b16 %v708
      %v1101 = vunpack.c.h.b16 %v708
      %v1102 = vunpack.c.l.b16 %v709
      %v1103 = vunpack.c.h.b16 %v709
      %v1104 = vunpack.c.l.b16 %v710
      %v1105 = vunpack.c.h.b16 %v710
      %v1106 = vpack.c.b16 %v854, %v850
      %v1107 = vpack.c.b16 %v855, %v851
      %v1108 = vpack.c.b16 %v856, %v852
      %v1109 = vpack.c.b16 %v857, %v853
      %v1110 = vpack.c.b16 %v862, %v858
      %v1111 = vpack.c.b16 %v863, %v859
      %v1112 = vpack.c.b16 %v864, %v860
      %v1113 = vpack.c.b16 %v865, %v861
      %v1114 = vpack.c.b16 %v870, %v866
      %v1115 = vpack.c.b16 %v871, %v867
      %v1116 = vpack.c.b16 %v872, %v868
      %v1117 = vpack.c.b16 %v873, %v869
      %v1118 = vpack.c.b16 %v878, %v874
      %v1119 = vpack.c.b16 %v879, %v875
      %v1120 = vpack.c.b16 %v880, %v876
      %v1121 = vpack.c.b16 %v881, %v877
      %v1122 = vpack.c.b16 %v886, %v882
      %v1123 = vpack.c.b16 %v887, %v883
      %v1124 = vpack.c.b16 %v888, %v884
      %v1125 = vpack.c.b16 %v889, %v885
      %v1126 = vpack.c.b16 %v894, %v890
      %v1127 = vpack.c.b16 %v895, %v891
      %v1128 = vpack.c.b16 %v896, %v892
      %v1129 = vpack.c.b16 %v897, %v893
      %v1130 = vpack.c.b16 %v902, %v898
      %v1131 = vpack.c.b16 %v903, %v899
      %v1132 = vpack.c.b16 %v904, %v900
      %v1133 = vpack.c.b16 %v905, %v901
      %v1134 = vpack.c.b16 %v910, %v906
      %v1135 = vpack.c.b16 %v911, %v907
      %v1136 = vpack.c.b16 %v912, %v908
      %v1137 = vpack.c.b16 %v913, %v909
      %v1138 = vpack.c.b16 %v918, %v914
      %v1139 = vpack.c.b16 %v919, %v915
      %v1140 = vpack.c.b16 %v920, %v916
      %v1141 = vpack.c.b16 %v921, %v917
      %v1142 = vpack.c.b16 %v926, %v922
      %v1143 = vpack.c.b16 %v927, %v923
      %v1144 = vpack.c.b16 %v928, %v924
      %v1145 = vpack.c.b16 %v929, %v925
      %v1146 = vpack.c.b16 %v934, %v930
      %v1147 = vpack.c.b16 %v935, %v931
      %v1148 = vpack.c.b16 %v936, %v932
      %v1149 = vpack.c.b16 %v937, %v933
      %v1150 = vpack.c.b16 %v942, %v938
      %v1151 = vpack.c.b16 %v943, %v939
      %v1152 = vpack.c.b16 %v944, %v940
      %v1153 = vpack.c.b16 %v945, %v941
      %v1154 = vpack.c.b16 %v950, %v946
      %v1155 = vpack.c.b16 %v951, %v947
      %v1156 = vpack.c.b16 %v952, %v948
      %v1157 = vpack.c.b16 %v953, %v949
      %v1158 = vpack.c.b16 %v958, %v954
      %v1159 = vpack.c.b16 %v959, %v955
      %v1160 = vpack.c.b16 %v960, %v956
      %v1161 = vpack.c.b16 %v961, %v957
      %v1162 = vpack.c.b16 %v966, %v962
      %v1163 = vpack.c.b16 %v967, %v963
      %v1164 = vpack.c.b16 %v968, %v964
      %v1165 = vpack.c.b16 %v969, %v965
      %v1166 = vpack.c.b16 %v974, %v970
      %v1167 = vpack.c.b16 %v975, %v971
      %v1168 = vpack.c.b16 %v976, %v972
      %v1169 = vpack.c.b16 %v977, %v973
      %v1170 = vpack.c.b16 %v982, %v978
      %v1171 = vpack.c.b16 %v983, %v979
      %v1172 = vpack.c.b16 %v984, %v980
      %v1173 = vpack.c.b16 %v985, %v981
      %v1174 = vpack.c.b16 %v990, %v986
      %v1175 = vpack.c.b16 %v991, %v987
      %v1176 = vpack.c.b16 %v992, %v988
      %v1177 = vpack.c.b16 %v993, %v989
      %v1178 = vpack.c.b16 %v998, %v994
      %v1179 = vpack.c.b16 %v999, %v995
      %v1180 = vpack.c.b16 %v1000, %v996
      %v1181 = vpack.c.b16 %v1001, %v997
      %v1182 = vpack.c.b16 %v1006, %v1002
      %v1183 = vpack.c.b16 %v1007, %v1003
      %v1184 = vpack.c.b16 %v1008, %v1004
      %v1185 = vpack.c.b16 %v1009, %v1005
      %v1186 = vpack.c.b16 %v1014, %v1010
      %v1187 = vpack.c.b16 %v1015, %v1011
      %v1188 = vpack.c.b16 %v1016, %v1012
      %v1189 = vpack.c.b16 %v1017, %v1013
      %v1190 = vpack.c.b16 %v1022, %v1018
      %v1191 = vpack.c.b16 %v1023, %v1019
      %v1192 = vpack.c.b16 %v1024, %v1020
      %v1193 = vpack.c.b16 %v1025, %v1021
      %v1194 = vpack.c.b16 %v1030, %v1026
      %v1195 = vpack.c.b16 %v1031, %v1027
      %v1196 = vpack.c.b16 %v1032, %v1028
      %v1197 = vpack.c.b16 %v1033, %v1029
      %v1198 = vpack.c.b16 %v1038, %v1034
      %v1199 = vpack.c.b16 %v1039, %v1035
      %v1200 = vpack.c.b16 %v1040, %v1036
      %v1201 = vpack.c.b16 %v1041, %v1037
      %v1202 = vpack.c.b16 %v1046, %v1042
      %v1203 = vpack.c.b16 %v1047, %v1043
      %v1204 = vpack.c.b16 %v1048, %v1044
      %v1205 = vpack.c.b16 %v1049, %v1045
      %v1206 = vpack.c.b16 %v1054, %v1050
      %v1207 = vpack.c.b16 %v1055, %v1051
      %v1208 = vpack.c.b16 %v1056, %v1052
      %v1209 = vpack.c.b16 %v1057, %v1053
      %v1210 = vpack.c.b16 %v1062, %v1058
      %v1211 = vpack.c.b16 %v1063, %v1059
      %v1212 = vpack.c.b16 %v1064, %v1060
      %v1213 = vpack.c.b16 %v1065, %v1061
      %v1214 = vpack.c.b16 %v1070, %v1066
      %v1215 = vpack.c.b16 %v1071, %v1067
      %v1216 = vpack.c.b16 %v1072, %v1068
      %v1217 = vpack.c.b16 %v1073, %v1069
      %v1218 = vpack.c.b16 %v1078, %v1074
      %v1219 = vpack.c.b16 %v1079, %v1075
      %v1220 = vpack.c.b16 %v1080, %v1076
      %v1221 = vpack.c.b16 %v1081, %v1077
      %v1222 = vpack.c.b16 %v1086, %v1082
      %v1223 = vpack.c.b16 %v1087, %v1083
      %v1224 = vpack.c.b16 %v1088, %v1084
      %v1225 = vpack.c.b16 %v1089, %v1085
      %v1226 = vpack.c.b16 %v1094, %v1090
      %v1227 = vpack.c.b16 %v1095, %v1091
      %v1228 = vpack.c.b16 %v1096, %v1092
      %v1229 = vpack.c.b16 %v1097, %v1093
      %v1230 = vpack.c.b16 %v1102, %v1098
      %v1231 = vpack.c.b16 %v1103, %v1099
      %v1232 = vpack.c.b16 %v1104, %v1100
      %v1233 = vpack.c.b16 %v1105, %v1101
      %1362 = vmatpush.bf16.msra.mxu0 %v1134
      %1363 = vmatpush.bf16.msra.mxu0 %v1130
      %1364 = vmatpush.bf16.msra.mxu0 %v1126
      %1365 = vmatpush.bf16.msra.mxu0 %v1122
      %1366 = vmatpush.bf16.msra.mxu0 %v1118
      %1367 = vmatpush.bf16.msra.mxu0 %v1114
      %1368 = vmatpush.bf16.msra.mxu0 %v1110
      %1369 = vmatpush.bf16.msra.mxu0 %v1106
      %1370 = vmatmul.bf16.gmra.mxu0 %v579
      %v1371 = vpop.f32.mrf.mxu0
      %v1372 = vadd.f32 %v714, %v1371
      %v1373 = vpop.f32.mrf.mxu0
      %1374 = vdwg.mxu0
      %1375 = vmatpush.bf16.msra.mxu0 %v1166
      %1376 = vmatpush.bf16.msra.mxu0 %v1162
      %1377 = vmatpush.bf16.msra.mxu0 %v1158
      %1378 = vmatpush.bf16.msra.mxu0 %v1154
      %1379 = vmatpush.bf16.msra.mxu0 %v1150
      %1380 = vmatpush.bf16.msra.mxu0 %v1146
      %1381 = vmatpush.bf16.msra.mxu0 %v1142
      %1382 = vmatpush.bf16.msra.mxu0 %v1138
      %1383 = vmatmul.bf16.gmra.mxu0 %v580
      %v1384 = vpop.f32.mrf.mxu0
      %v1385 = vadd.f32 %v1372, %v1384
      %v1386 = vpop.f32.mrf.mxu0
      %1387 = vdwg.mxu0
      %1388 = vmatpush.bf16.msra.mxu0 %v1198
      %1389 = vmatpush.bf16.msra.mxu0 %v1194
      %1390 = vmatpush.bf16.msra.mxu0 %v1190
      %1391 = vmatpush.bf16.msra.mxu0 %v1186
      %1392 = vmatpush.bf16.msra.mxu0 %v1182
      %1393 = vmatpush.bf16.msra.mxu0 %v1178
      %1394 = vmatpush.bf16.msra.mxu0 %v1174
      %1395 = vmatpush.bf16.msra.mxu0 %v1170
      %1396 = vmatmul.bf16.gmra.mxu0 %v581
      %v1397 = vpop.f32.mrf.mxu0
      %v1398 = vadd.f32 %v1385, %v1397
      %v1399 = vpop.f32.mrf.mxu0
      %1400 = vdwg.mxu0
      %1401 = vmatpush.bf16.msra.mxu0 %v1230
      %1402 = vmatpush.bf16.msra.mxu0 %v1226
      %1403 = vmatpush.bf16.msra.mxu0 %v1222
      %1404 = vmatpush.bf16.msra.mxu0 %v1218
      %1405 = vmatpush.bf16.msra.mxu0 %v1214
      %1406 = vmatpush.bf16.msra.mxu0 %v1210
      %1407 = vmatpush.bf16.msra.mxu0 %v1206
      %1408 = vmatpush.bf16.msra.mxu0 %v1202
      %1409 = vmatmul.bf16.gmra.mxu0 %v582
      %v1410 = vpop.f32.mrf.mxu0
      %v1411 = vadd.f32 %v1398, %v1410
      %v1412 = vpop.f32.mrf.mxu0
      %1413 = vdwg.mxu0
      %1414 = vmatpush.bf16.msra.mxu0 %v1135
      %1415 = vmatpush.bf16.msra.mxu0 %v1131
      %1416 = vmatpush.bf16.msra.mxu0 %v1127
      %1417 = vmatpush.bf16.msra.mxu0 %v1123
      %1418 = vmatpush.bf16.msra.mxu0 %v1119
      %1419 = vmatpush.bf16.msra.mxu0 %v1115
      %1420 = vmatpush.bf16.msra.mxu0 %v1111
      %1421 = vmatpush.bf16.msra.mxu0 %v1107
      %1422 = vmatmul.bf16.gmra.mxu0 %v579
      %v1423 = vpop.f32.mrf.mxu0
      %v1424 = vadd.f32 %v715, %v1423
      %v1425 = vpop.f32.mrf.mxu0
      %1426 = vdwg.mxu0
      %1427 = vmatpush.bf16.msra.mxu0 %v1167
      %1428 = vmatpush.bf16.msra.mxu0 %v1163
      %1429 = vmatpush.bf16.msra.mxu0 %v1159
      %1430 = vmatpush.bf16.msra.mxu0 %v1155
      %1431 = vmatpush.bf16.msra.mxu0 %v1151
      %1432 = vmatpush.bf16.msra.mxu0 %v1147
      %1433 = vmatpush.bf16.msra.mxu0 %v1143
      %1434 = vmatpush.bf16.msra.mxu0 %v1139
      %1435 = vmatmul.bf16.gmra.mxu0 %v580
      %v1436 = vpop.f32.mrf.mxu0
      %v1437 = vadd.f32 %v1424, %v1436
      %v1438 = vpop.f32.mrf.mxu0
      %1439 = vdwg.mxu0
      %1440 = vmatpush.bf16.msra.mxu0 %v1199
      %1441 = vmatpush.bf16.msra.mxu0 %v1195
      %1442 = vmatpush.bf16.msra.mxu0 %v1191
      %1443 = vmatpush.bf16.msra.mxu0 %v1187
      %1444 = vmatpush.bf16.msra.mxu0 %v1183
      %1445 = vmatpush.bf16.msra.mxu0 %v1179
      %1446 = vmatpush.bf16.msra.mxu0 %v1175
      %1447 = vmatpush.bf16.msra.mxu0 %v1171
      %1448 = vmatmul.bf16.gmra.mxu0 %v581
      %v1449 = vpop.f32.mrf.mxu0
      %v1450 = vadd.f32 %v1437, %v1449
      %v1451 = vpop.f32.mrf.mxu0
      %1452 = vdwg.mxu0
      %1453 = vmatpush.bf16.msra.mxu0 %v1231
      %1454 = vmatpush.bf16.msra.mxu0 %v1227
      %1455 = vmatpush.bf16.msra.mxu0 %v1223
      %1456 = vmatpush.bf16.msra.mxu0 %v1219
      %1457 = vmatpush.bf16.msra.mxu0 %v1215
      %1458 = vmatpush.bf16.msra.mxu0 %v1211
      %1459 = vmatpush.bf16.msra.mxu0 %v1207
      %1460 = vmatpush.bf16.msra.mxu0 %v1203
      %1461 = vmatmul.bf16.gmra.mxu0 %v582
      %v1462 = vpop.f32.mrf.mxu0
      %v1463 = vadd.f32 %v1450, %v1462
      %v1464 = vpop.f32.mrf.mxu0
      %1465 = vdwg.mxu0
      %1466 = vmatpush.bf16.msra.mxu0 %v1136
      %1467 = vmatpush.bf16.msra.mxu0 %v1132
      %1468 = vmatpush.bf16.msra.mxu0 %v1128
      %1469 = vmatpush.bf16.msra.mxu0 %v1124
      %1470 = vmatpush.bf16.msra.mxu0 %v1120
      %1471 = vmatpush.bf16.msra.mxu0 %v1116
      %1472 = vmatpush.bf16.msra.mxu0 %v1112
      %1473 = vmatpush.bf16.msra.mxu0 %v1108
      %1474 = vmatmul.bf16.gmra.mxu0 %v579
      %v1475 = vpop.f32.mrf.mxu0
      %v1476 = vadd.f32 %v716, %v1475
      %v1477 = vpop.f32.mrf.mxu0
      %1478 = vdwg.mxu0
      %1479 = vmatpush.bf16.msra.mxu0 %v1168
      %1480 = vmatpush.bf16.msra.mxu0 %v1164
      %1481 = vmatpush.bf16.msra.mxu0 %v1160
      %1482 = vmatpush.bf16.msra.mxu0 %v1156
      %1483 = vmatpush.bf16.msra.mxu0 %v1152
      %1484 = vmatpush.bf16.msra.mxu0 %v1148
      %1485 = vmatpush.bf16.msra.mxu0 %v1144
      %1486 = vmatpush.bf16.msra.mxu0 %v1140
      %1487 = vmatmul.bf16.gmra.mxu0 %v580
      %v1488 = vpop.f32.mrf.mxu0
      %v1489 = vadd.f32 %v1476, %v1488
      %v1490 = vpop.f32.mrf.mxu0
      %1491 = vdwg.mxu0
      %1492 = vmatpush.bf16.msra.mxu0 %v1200
      %1493 = vmatpush.bf16.msra.mxu0 %v1196
      %1494 = vmatpush.bf16.msra.mxu0 %v1192
      %1495 = vmatpush.bf16.msra.mxu0 %v1188
      %1496 = vmatpush.bf16.msra.mxu0 %v1184
      %1497 = vmatpush.bf16.msra.mxu0 %v1180
      %1498 = vmatpush.bf16.msra.mxu0 %v1176
      %1499 = vmatpush.bf16.msra.mxu0 %v1172
      %1500 = vmatmul.bf16.gmra.mxu0 %v581
      %v1501 = vpop.f32.mrf.mxu0
      %v1502 = vadd.f32 %v1489, %v1501
      %v1503 = vpop.f32.mrf.mxu0
      %1504 = vdwg.mxu0
      %1505 = vmatpush.bf16.msra.mxu0 %v1232
      %1506 = vmatpush.bf16.msra.mxu0 %v1228
      %1507 = vmatpush.bf16.msra.mxu0 %v1224
      %1508 = vmatpush.bf16.msra.mxu0 %v1220
      %1509 = vmatpush.bf16.msra.mxu0 %v1216
      %1510 = vmatpush.bf16.msra.mxu0 %v1212
      %1511 = vmatpush.bf16.msra.mxu0 %v1208
      %1512 = vmatpush.bf16.msra.mxu0 %v1204
      %1513 = vmatmul.bf16.gmra.mxu0 %v582
      %v1514 = vpop.f32.mrf.mxu0
      %v1515 = vadd.f32 %v1502, %v1514
      %v1516 = vpop.f32.mrf.mxu0
      %1517 = vdwg.mxu0
      %1518 = vmatpush.bf16.msra.mxu0 %v1137
      %1519 = vmatpush.bf16.msra.mxu0 %v1133
      %1520 = vmatpush.bf16.msra.mxu0 %v1129
      %1521 = vmatpush.bf16.msra.mxu0 %v1125
      %1522 = vmatpush.bf16.msra.mxu0 %v1121
      %1523 = vmatpush.bf16.msra.mxu0 %v1117
      %1524 = vmatpush.bf16.msra.mxu0 %v1113
      %1525 = vmatpush.bf16.msra.mxu0 %v1109
      %1526 = vmatmul.bf16.gmra.mxu0 %v579
      %v1527 = vpop.f32.mrf.mxu0
      %v1528 = vadd.f32 %v717, %v1527
      %v1529 = vpop.f32.mrf.mxu0
      %1530 = vdwg.mxu0
      %1531 = vmatpush.bf16.msra.mxu0 %v1169
      %1532 = vmatpush.bf16.msra.mxu0 %v1165
      %1533 = vmatpush.bf16.msra.mxu0 %v1161
      %1534 = vmatpush.bf16.msra.mxu0 %v1157
      %1535 = vmatpush.bf16.msra.mxu0 %v1153
      %1536 = vmatpush.bf16.msra.mxu0 %v1149
      %1537 = vmatpush.bf16.msra.mxu0 %v1145
      %1538 = vmatpush.bf16.msra.mxu0 %v1141
      %1539 = vmatmul.bf16.gmra.mxu0 %v580
      %v1540 = vpop.f32.mrf.mxu0
      %v1541 = vadd.f32 %v1528, %v1540
      %v1542 = vpop.f32.mrf.mxu0
      %1543 = vdwg.mxu0
      %1544 = vmatpush.bf16.msra.mxu0 %v1201
      %1545 = vmatpush.bf16.msra.mxu0 %v1197
      %1546 = vmatpush.bf16.msra.mxu0 %v1193
      %1547 = vmatpush.bf16.msra.mxu0 %v1189
      %1548 = vmatpush.bf16.msra.mxu0 %v1185
      %1549 = vmatpush.bf16.msra.mxu0 %v1181
      %1550 = vmatpush.bf16.msra.mxu0 %v1177
      %1551 = vmatpush.bf16.msra.mxu0 %v1173
      %1552 = vmatmul.bf16.gmra.mxu0 %v581
      %v1553 = vpop.f32.mrf.mxu0
      %v1554 = vadd.f32 %v1541, %v1553
      %v1555 = vpop.f32.mrf.mxu0
      %1556 = vdwg.mxu0
      %1557 = vmatpush.bf16.msra.mxu0 %v1233
      %1558 = vmatpush.bf16.msra.mxu0 %v1229
      %1559 = vmatpush.bf16.msra.mxu0 %v1225
      %1560 = vmatpush.bf16.msra.mxu0 %v1221
      %1561 = vmatpush.bf16.msra.mxu0 %v1217
      %1562 = vmatpush.bf16.msra.mxu0 %v1213
      %1563 = vmatpush.bf16.msra.mxu0 %v1209
      %1564 = vmatpush.bf16.msra.mxu0 %v1205
      %1565 = vmatmul.bf16.gmra.mxu0 %v582
      %v1566 = vpop.f32.mrf.mxu0
      %v1567 = vadd.f32 %v1554, %v1566
      %v1568 = vpop.f32.mrf.mxu0
      %1569 = vdwg.mxu0
      %v1570 = vmax.f32 %v1411, 0.0
      %v1571 = vmax.f32 %v1463, 0.0
      %v1572 = vmax.f32 %v1515, 0.0
      %v1573 = vmax.f32 %v1567, 0.0
      %v1574 = vpack.c.bf16 %v1570, %v1570
      %v1575 = vpack.c.bf16 %v1571, %v1571
      %v1576 = vpack.c.bf16 %v1572, %v1572
      %v1577 = vpack.c.bf16 %v1573, %v1573
      %v1578 = vld [vmem:[%s392] sm:$0xf]
      %v1579 = vld [vmem:[%s392 + $0x4] sm:$0xf]
      %v1580 = vld [vmem:[%s392 + $0x8] sm:$0xf]
      %v1581 = vld [vmem:[%s392 + $0xc] sm:$0xf]
      %v1582 = vld [vmem:[%s392 + $0x10] sm:$0xf]
      %v1583 = vld [vmem:[%s392 + $0x14] sm:$0xf]
      %v1584 = vld [vmem:[%s392 + $0x18] sm:$0xf]
      %v1585 = vld [vmem:[%s392 + $0x1c] sm:$0xf]
      %v1586 = vld [vmem:[%s392 + $0x20] sm:$0xf]
      %v1587 = vld [vmem:[%s392 + $0x24] sm:$0xf]
      %v1588 = vld [vmem:[%s392 + $0x28] sm:$0xf]
      %v1589 = vld [vmem:[%s392 + $0x2c] sm:$0xf]
      %v1590 = vld [vmem:[%s392 + $0x30] sm:$0xf]
      %v1591 = vld [vmem:[%s392 + $0x34] sm:$0xf]
      %v1592 = vld [vmem:[%s392 + $0x38] sm:$0xf]
      %v1593 = vld [vmem:[%s392 + $0x3c] sm:$0xf]
      %v1594 = vld [vmem:[%s392 + $0x40] sm:$0xf]
      %v1595 = vld [vmem:[%s392 + $0x44] sm:$0xf]
      %v1596 = vld [vmem:[%s392 + $0x48] sm:$0xf]
      %v1597 = vld [vmem:[%s392 + $0x4c] sm:$0xf]
      %v1598 = vld [vmem:[%s392 + $0x50] sm:$0xf]
      %v1599 = vld [vmem:[%s392 + $0x54] sm:$0xf]
      %v1600 = vld [vmem:[%s392 + $0x58] sm:$0xf]
      %v1601 = vld [vmem:[%s392 + $0x5c] sm:$0xf]
      %v1602 = vld [vmem:[%s392 + $0x60] sm:$0xf]
      %v1603 = vld [vmem:[%s392 + $0x64] sm:$0xf]
      %v1604 = vld [vmem:[%s392 + $0x68] sm:$0xf]
      %v1605 = vld [vmem:[%s392 + $0x6c] sm:$0xf]
      %v1606 = vld [vmem:[%s392 + $0x70] sm:$0xf]
      %v1607 = vld [vmem:[%s392 + $0x74] sm:$0xf]
      %v1608 = vld [vmem:[%s392 + $0x78] sm:$0xf]
      %v1609 = vld [vmem:[%s392 + $0x7c] sm:$0xf]
      %v1610 = vld [vmem:[%s392 + $0x80] sm:$0xf]
      %v1611 = vld [vmem:[%s392 + $0x84] sm:$0xf]
      %v1612 = vld [vmem:[%s392 + $0x88] sm:$0xf]
      %v1613 = vld [vmem:[%s392 + $0x8c] sm:$0xf]
      %v1614 = vld [vmem:[%s392 + $0x90] sm:$0xf]
      %v1615 = vld [vmem:[%s392 + $0x94] sm:$0xf]
      %v1616 = vld [vmem:[%s392 + $0x98] sm:$0xf]
      %v1617 = vld [vmem:[%s392 + $0x9c] sm:$0xf]
      %v1618 = vld [vmem:[%s392 + $0xa0] sm:$0xf]
      %v1619 = vld [vmem:[%s392 + $0xa4] sm:$0xf]
      %v1620 = vld [vmem:[%s392 + $0xa8] sm:$0xf]
      %v1621 = vld [vmem:[%s392 + $0xac] sm:$0xf]
      %v1622 = vld [vmem:[%s392 + $0xb0] sm:$0xf]
      %v1623 = vld [vmem:[%s392 + $0xb4] sm:$0xf]
      %v1624 = vld [vmem:[%s392 + $0xb8] sm:$0xf]
      %v1625 = vld [vmem:[%s392 + $0xbc] sm:$0xf]
      %v1626 = vld [vmem:[%s392 + $0xc0] sm:$0xf]
      %v1627 = vld [vmem:[%s392 + $0xc4] sm:$0xf]
      %v1628 = vld [vmem:[%s392 + $0xc8] sm:$0xf]
      %v1629 = vld [vmem:[%s392 + $0xcc] sm:$0xf]
      %v1630 = vld [vmem:[%s392 + $0xd0] sm:$0xf]
      %v1631 = vld [vmem:[%s392 + $0xd4] sm:$0xf]
      %v1632 = vld [vmem:[%s392 + $0xd8] sm:$0xf]
      %v1633 = vld [vmem:[%s392 + $0xdc] sm:$0xf]
      %v1634 = vld [vmem:[%s392 + $0xe0] sm:$0xf]
      %v1635 = vld [vmem:[%s392 + $0xe4] sm:$0xf]
      %v1636 = vld [vmem:[%s392 + $0xe8] sm:$0xf]
      %v1637 = vld [vmem:[%s392 + $0xec] sm:$0xf]
      %v1638 = vld [vmem:[%s392 + $0xf0] sm:$0xf]
      %v1639 = vld [vmem:[%s392 + $0xf4] sm:$0xf]
      %v1640 = vld [vmem:[%s392 + $0xf8] sm:$0xf]
      %v1641 = vld [vmem:[%s392 + $0xfc] sm:$0xf]
      %v1642 = vld [vmem:[%s397 + $0x2] sm:$0x1]
      %v1643 = vperm.slane %v1642, 0
      %v1708 = vunpack.c.l.b16 %v1578
      %v1709 = vunpack.c.l.b16 %v1579
      %v1710 = vunpack.c.l.b16 %v1580
      %v1711 = vunpack.c.l.b16 %v1581
      %v1712 = vunpack.c.l.b16 %v1582
      %v1713 = vunpack.c.l.b16 %v1583
      %v1714 = vunpack.c.l.b16 %v1584
      %v1715 = vunpack.c.l.b16 %v1585
      %v1716 = vunpack.c.l.b16 %v1586
      %v1717 = vunpack.c.l.b16 %v1587
      %v1718 = vunpack.c.l.b16 %v1588
      %v1719 = vunpack.c.l.b16 %v1589
      %v1720 = vunpack.c.l.b16 %v1590
      %v1721 = vunpack.c.l.b16 %v1591
      %v1722 = vunpack.c.l.b16 %v1592
      %v1723 = vunpack.c.l.b16 %v1593
      %v1724 = vunpack.c.l.b16 %v1594
      %v1725 = vunpack.c.l.b16 %v1595
      %v1726 = vunpack.c.l.b16 %v1596
      %v1727 = vunpack.c.l.b16 %v1597
      %v1728 = vunpack.c.l.b16 %v1598
      %v1729 = vunpack.c.l.b16 %v1599
      %v1730 = vunpack.c.l.b16 %v1600
      %v1731 = vunpack.c.l.b16 %v1601
      %v1732 = vunpack.c.l.b16 %v1602
      %v1733 = vunpack.c.l.b16 %v1603
      %v1734 = vunpack.c.l.b16 %v1604
      %v1735 = vunpack.c.l.b16 %v1605
      %v1736 = vunpack.c.l.b16 %v1606
      %v1737 = vunpack.c.l.b16 %v1607
      %v1738 = vunpack.c.l.b16 %v1608
      %v1739 = vunpack.c.l.b16 %v1609
      %v1740 = vunpack.c.l.b16 %v1610
      %v1741 = vunpack.c.l.b16 %v1611
      %v1742 = vunpack.c.l.b16 %v1612
      %v1743 = vunpack.c.l.b16 %v1613
      %v1744 = vunpack.c.l.b16 %v1614
      %v1745 = vunpack.c.l.b16 %v1615
      %v1746 = vunpack.c.l.b16 %v1616
      %v1747 = vunpack.c.l.b16 %v1617
      %v1748 = vunpack.c.l.b16 %v1618
      %v1749 = vunpack.c.l.b16 %v1619
      %v1750 = vunpack.c.l.b16 %v1620
      %v1751 = vunpack.c.l.b16 %v1621
      %v1752 = vunpack.c.l.b16 %v1622
      %v1753 = vunpack.c.l.b16 %v1623
      %v1754 = vunpack.c.l.b16 %v1624
      %v1755 = vunpack.c.l.b16 %v1625
      %v1756 = vunpack.c.l.b16 %v1626
      %v1757 = vunpack.c.l.b16 %v1627
      %v1758 = vunpack.c.l.b16 %v1628
      %v1759 = vunpack.c.l.b16 %v1629
      %v1760 = vunpack.c.l.b16 %v1630
      %v1761 = vunpack.c.l.b16 %v1631
      %v1762 = vunpack.c.l.b16 %v1632
      %v1763 = vunpack.c.l.b16 %v1633
      %v1764 = vunpack.c.l.b16 %v1634
      %v1765 = vunpack.c.l.b16 %v1635
      %v1766 = vunpack.c.l.b16 %v1636
      %v1767 = vunpack.c.l.b16 %v1637
      %v1768 = vunpack.c.l.b16 %v1638
      %v1769 = vunpack.c.l.b16 %v1639
      %v1770 = vunpack.c.l.b16 %v1640
      %v1771 = vunpack.c.l.b16 %v1641
      %v1772 = vpack.c.b16 %v1709, %v1708
      %v1773 = vpack.c.b16 %v1711, %v1710
      %v1774 = vpack.c.b16 %v1713, %v1712
      %v1775 = vpack.c.b16 %v1715, %v1714
      %v1776 = vpack.c.b16 %v1717, %v1716
      %v1777 = vpack.c.b16 %v1719, %v1718
      %v1778 = vpack.c.b16 %v1721, %v1720
      %v1779 = vpack.c.b16 %v1723, %v1722
      %v1780 = vpack.c.b16 %v1725, %v1724
      %v1781 = vpack.c.b16 %v1727, %v1726
      %v1782 = vpack.c.b16 %v1729, %v1728
      %v1783 = vpack.c.b16 %v1731, %v1730
      %v1784 = vpack.c.b16 %v1733, %v1732
      %v1785 = vpack.c.b16 %v1735, %v1734
      %v1786 = vpack.c.b16 %v1737, %v1736
      %v1787 = vpack.c.b16 %v1739, %v1738
      %v1788 = vpack.c.b16 %v1741, %v1740
      %v1789 = vpack.c.b16 %v1743, %v1742
      %v1790 = vpack.c.b16 %v1745, %v1744
      %v1791 = vpack.c.b16 %v1747, %v1746
      %v1792 = vpack.c.b16 %v1749, %v1748
      %v1793 = vpack.c.b16 %v1751, %v1750
      %v1794 = vpack.c.b16 %v1753, %v1752
      %v1795 = vpack.c.b16 %v1755, %v1754
      %v1796 = vpack.c.b16 %v1757, %v1756
      %v1797 = vpack.c.b16 %v1759, %v1758
      %v1798 = vpack.c.b16 %v1761, %v1760
      %v1799 = vpack.c.b16 %v1763, %v1762
      %v1800 = vpack.c.b16 %v1765, %v1764
      %v1801 = vpack.c.b16 %v1767, %v1766
      %v1802 = vpack.c.b16 %v1769, %v1768
      %v1803 = vpack.c.b16 %v1771, %v1770
      %1836 = vmatpush.bf16.msra.mxu0 %v1779
      %1837 = vmatpush.bf16.msra.mxu0 %v1778
      %1838 = vmatpush.bf16.msra.mxu0 %v1777
      %1839 = vmatpush.bf16.msra.mxu0 %v1776
      %1840 = vmatpush.bf16.msra.mxu0 %v1775
      %1841 = vmatpush.bf16.msra.mxu0 %v1774
      %1842 = vmatpush.bf16.msra.mxu0 %v1773
      %1843 = vmatpush.bf16.msra.mxu0 %v1772
      %1844 = vmatmul.bf16.gmra.mxu0 %v1574
      %v1845 = vpop.f32.mrf.mxu0
      %v1846 = vadd.f32 %v1643, %v1845
      %v1847 = vpop.f32.mrf.mxu0
      %1848 = vdwg.mxu0
      %1849 = vmatpush.bf16.msra.mxu0 %v1787
      %1850 = vmatpush.bf16.msra.mxu0 %v1786
      %1851 = vmatpush.bf16.msra.mxu0 %v1785
      %1852 = vmatpush.bf16.msra.mxu0 %v1784
      %1853 = vmatpush.bf16.msra.mxu0 %v1783
      %1854 = vmatpush.bf16.msra.mxu0 %v1782
      %1855 = vmatpush.bf16.msra.mxu0 %v1781
      %1856 = vmatpush.bf16.msra.mxu0 %v1780
      %1857 = vmatmul.bf16.gmra.mxu0 %v1575
      %v1858 = vpop.f32.mrf.mxu0
      %v1859 = vadd.f32 %v1846, %v1858
      %v1860 = vpop.f32.mrf.mxu0
      %1861 = vdwg.mxu0
      %1862 = vmatpush.bf16.msra.mxu0 %v1795
      %1863 = vmatpush.bf16.msra.mxu0 %v1794
      %1864 = vmatpush.bf16.msra.mxu0 %v1793
      %1865 = vmatpush.bf16.msra.mxu0 %v1792
      %1866 = vmatpush.bf16.msra.mxu0 %v1791
      %1867 = vmatpush.bf16.msra.mxu0 %v1790
      %1868 = vmatpush.bf16.msra.mxu0 %v1789
      %1869 = vmatpush.bf16.msra.mxu0 %v1788
      %1870 = vmatmul.bf16.gmra.mxu0 %v1576
      %v1871 = vpop.f32.mrf.mxu0
      %v1872 = vadd.f32 %v1859, %v1871
      %v1873 = vpop.f32.mrf.mxu0
      %1874 = vdwg.mxu0
      %1875 = vmatpush.bf16.msra.mxu0 %v1803
      %1876 = vmatpush.bf16.msra.mxu0 %v1802
      %1877 = vmatpush.bf16.msra.mxu0 %v1801
      %1878 = vmatpush.bf16.msra.mxu0 %v1800
      %1879 = vmatpush.bf16.msra.mxu0 %v1799
      %1880 = vmatpush.bf16.msra.mxu0 %v1798
      %1881 = vmatpush.bf16.msra.mxu0 %v1797
      %1882 = vmatpush.bf16.msra.mxu0 %v1796
      %1883 = vmatmul.bf16.gmra.mxu0 %v1577
      %v1884 = vpop.f32.mrf.mxu0
      %v1885 = vadd.f32 %v1872, %v1884
      %v1886 = vpop.f32.mrf.mxu0
      %1887 = vdwg.mxu0
      %1888 = vst [vmem:[%s404] sm:$0x3] %v1885
      %p1889 = scmp.lt.s32.totalorder %s22, 1
      %s1890 = scalar_select %p1889, %s22, 1
      %p1891 = scmp.lt.s32.totalorder %s23, 0
      %s1892 = scalar_select %p1891, %s23, 0
      %s1893 = sadd.s32 %s1892, %s1890
      %s1894 = smul.addr %s1893, 2
      %s1895 = scalar_lea.vmem %s7, %s1894
      // Predicated region
      $region49: #{quantile_critics_forward.1} parent=47 // pred_check
        %p1896 = pneg %p232
      $region50: #{quantile_critics_forward.1} parent=47 // pred_check_branch
        %1898 = sbr.rel (%p1896) target = $region52
      $region51: #{quantile_critics_forward.1} parent=47 // pred_region
        _
      $region52: #{quantile_critics_forward.1} parent=47 // pred_fallthru
        _
    $region48: #{quantile_critics_forward.1} parent=5 // pred_fallthru
      _
    %p1899 = scmp.le.s32.totalorder 2, %s13
    // Predicated region
    $region53: #{quantile_critics_forward.1} parent=5 // pred_check
      %p1900 = pneg %p1899
    $region54: #{quantile_critics_forward.1} parent=5 // pred_check_branch
      %1902 = sbr.rel (%p1900) target = $region56
    $region55: #{quantile_critics_forward.1} parent=5 // pred_region
      %s1903 = ssub.s32 %s13, 2
      // Predicated region
      $region57: #{quantile_critics_forward.1} parent=55 // pred_check
        %p1904 = pneg %p238
      $region58: #{quantile_critics_forward.1} parent=55 // pred_check_branch
        %1906 = sbr.rel (%p1904) target = $region60
      $region59: #{quantile_critics_forward.1} parent=55 // pred_region
        %p1907 = scmp.lt.s32.totalorder %s24, 1
        %s1908 = scalar_select %p1907, %s24, 1
        %p1909 = scmp.lt.s32.totalorder %s25, 0
        %s1910 = scalar_select %p1909, %s25, 0
        %s1911 = sadd.s32 %s1910, %s1908
        %s1912 = smul.addr %s1911, 2
        %s1913 = scalar_lea.vmem %s7, %s1912
      $region60: #{quantile_critics_forward.1} parent=55 // pred_fallthru
        _
    $region56: #{quantile_critics_forward.1} parent=5 // pred_fallthru
      _
  $region6: #{quantile_critics_forward.1} parent=0 // loop_footer
    %s17 = sadd.s32 1, %s13
  $region7: #{quantile_critics_forward.1} parent=0 // loop_footer_branch
    %12 = sbr.rel target = $region3
  $region8: #{quantile_critics_forward.1} parent=0 // loop_exit
    _

</llo_original>
